<compile_context>
chip_gen: v5e
topology: v5e:2x2
jax: 0.10.0
libtpu: 0.0.40
codegen_flags: <defaults>
</compile_context>

<pallas_src>
import jax
import jax.numpy as jnp
from jax import lax
from jax.experimental import pallas as pl
from jax.experimental.pallas import tpu as pltpu

EMB_DIM = 256
HID1 = 512
HID2 = 256
LANE = 128
SUB = 8


def _round_up(x, m):
    return ((x + m - 1) // m) * m


# ----------------------------------------------------------------------------
# Path A: one-hot counts @ emb tile on the MXU (small vocabularies).
# ----------------------------------------------------------------------------
def _onehot_kernel(ids_ref, len_ref, emb_ref,
                   w1_ref, b1_ref, w2_ref, b2_ref, w3_ref, b3_ref,
                   out_ref, pooled_acc, idsm_scr, invlen_scr):
    k = pl.program_id(1)                       # vocab-tile index (reduction axis)
    BT, Lp = ids_ref.shape
    VT = emb_ref.shape[0]

    # Per-batch-tile setup hoisted to the first vocab tile only.
    @pl.when(k == 0)
    def _init():
        pooled_acc[...] = jnp.zeros_like(pooled_acc)
        lengths = len_ref[...]                                         # (BT,1) i32
        invlen_scr[...] = 1.0 / jnp.maximum(lengths, 1).astype(jnp.float32)
        t_iota = lax.broadcasted_iota(jnp.int32, (BT, Lp), 1)
        idsm_scr[...] = jnp.where(t_iota < lengths, ids_ref[...], -1)  # pads -> -1

    ids_m = idsm_scr[...]                                              # (BT, Lp)
    v_iota = lax.broadcasted_iota(jnp.int32, (BT, VT), 1) + k * VT

    # int32 partial accumulators (bool compare -> int add), converted to the
    # matmul dtype once after the loop.
    n_acc = 2
    accs = [jnp.zeros((BT, VT), jnp.int32) for _ in range(n_acc)]
    for t in range(Lp):                        # static, fully vectorized per token
        accs[t % n_acc] = accs[t % n_acc] + (
            ids_m[:, t:t + 1] == v_iota).astype(jnp.int32)
    counts = accs[0]
    for a in accs[1:]:
        counts = counts + a

    # counts <= Lp, exact in bf16 while Lp <= 256; otherwise fall back to f32.
    cdt = jnp.bfloat16 if Lp <= 256 else jnp.float32
    pooled_acc[...] += jnp.dot(counts.astype(cdt), emb_ref[...].astype(cdt),
                               preferred_element_type=jnp.float32)

    # MLP classifier on the MXU once pooling over all vocab tiles is done.
    @pl.when(k == pl.num_programs(1) - 1)
    def _mlp():
        h0 = pooled_acc[...] * invlen_scr[...]          # 1/len applied once here
        h1 = jnp.maximum(
            jnp.dot(h0.astype(jnp.bfloat16), w1_ref[...],
                    preferred_element_type=jnp.float32) + b1_ref[...], 0.0)
        # TODO(synk): nn.Dropout(0.5) is identity in eval/inference; not applied.
        h2 = jnp.maximum(
            jnp.dot(h1.astype(jnp.bfloat16), w2_ref[...],
                    preferred_element_type=jnp.float32) + b2_ref[...], 0.0)
        out_ref[...] = (
            jnp.dot(h2.astype(jnp.bfloat16), w3_ref[...],
                    preferred_element_type=jnp.float32) + b3_ref[...])


# ----------------------------------------------------------------------------
# Path B: per-bag DMA row gather (realistic / large vocabularies).
# ----------------------------------------------------------------------------
def _gather_kernel(ids_sm, len_sm, emb_hbm,
                   w1_ref, b1_ref, w2_ref, b2_ref, w3_ref, b3_ref,
                   out_ref, rowbuf, sem, pooled):
    i = pl.program_id(0)                       # batch-tile index
    BT = pooled.shape[0]
    _, Lmax, _ = rowbuf.shape

    def issue(b, slot):
        base = (i * BT + b) * Lmax
        for t in range(Lmax):                  # static unroll: Lmax row DMAs / bag
            row = ids_sm[base + t]
            pltpu.make_async_copy(emb_hbm.at[row], rowbuf.at[slot, t],
                                  sem.at[slot, t]).start()

    def wait_rows(slot):
        for t in range(Lmax):
            pltpu.make_async_copy(emb_hbm.at[0], rowbuf.at[slot, t],
                                  sem.at[slot, t]).wait()

    issue(0, 0)                                # prime slot 0

    @pl.loop(0, BT)
    def _(b):
        slot = b & 1

        @pl.when(b + 1 < BT)
        def _():                               # prefetch next bag into other slot
            issue(b + 1, 1 - slot)

        wait_rows(slot)
        L = len_sm[i * BT + b]
        rows = rowbuf[slot].astype(jnp.float32)                         # (Lmax, D)
        mask = (lax.broadcasted_iota(jnp.int32, (Lmax, 1), 0) < L
                ).astype(jnp.float32)
        inv = 1.0 / jnp.maximum(L, 1).astype(jnp.float32)
        pooled[pl.ds(b, 1), :] = jnp.sum(rows * mask, axis=0, keepdims=True) * inv

    h0 = pooled[...]
    h1 = jnp.maximum(
        jnp.dot(h0.astype(jnp.bfloat16), w1_ref[...],
                preferred_element_type=jnp.float32) + b1_ref[...], 0.0)
    # TODO(synk): nn.Dropout(0.5) is identity in eval/inference; not applied.
    h2 = jnp.maximum(
        jnp.dot(h1.astype(jnp.bfloat16), w2_ref[...],
                preferred_element_type=jnp.float32) + b2_ref[...], 0.0)
    out_ref[...] = (
        jnp.dot(h2.astype(jnp.bfloat16), w3_ref[...],
                preferred_element_type=jnp.float32) + b3_ref[...])


# ----------------------------------------------------------------------------
# Wrapper
# ----------------------------------------------------------------------------
def text_classification_forward(ids, lengths, params, *,
                                batch_tile=None, vocab_tile=None, pooling=None):
    ids = ids.astype(jnp.int32)
    lengths = lengths.astype(jnp.int32)
    B, Lmax = ids.shape
    V, D = params["emb"].shape
    C = params["w3"].shape[1]
    assert D == EMB_DIM

    if pooling is None:
        pooling = "gather" if V > 4096 else "onehot"

    # Batch tile: 256-row tiles feed the 256-wide MXU on v6e/v7x; keep >=2 tiles
    # for large batches so both v7x TensorCores get work on the parallel axis.
    if batch_tile is None:
        batch_tile = min(256, _round_up(B, SUB))
        if B >= 512:
            batch_tile = min(batch_tile, _round_up(_round_up(B, SUB) // 2, SUB))
    Bp = _round_up(B, batch_tile)
    n_bt = Bp // batch_tile

    ids_p = jnp.zeros((Bp, Lmax), jnp.int32).at[:B, :].set(ids)
    len_col = jnp.zeros((Bp, 1), jnp.int32).at[:B, 0].set(lengths)

    # bf16 table / weights, f32 biases & f32 accumulation.
    emb = params["emb"].astype(jnp.bfloat16)
    w1 = params["w1"].astype(jnp.bfloat16)
    w2 = params["w2"].astype(jnp.bfloat16)
    b1 = params["b1"].reshape(1, HID1).astype(jnp.float32)
    b2 = params["b2"].reshape(1, HID2).astype(jnp.float32)

    # Lane-dense logits block (unmasked vst); sliced back in the wrapper.
    Cp = _round_up(C, LANE)
    w3 = jnp.zeros((HID2, Cp), jnp.bfloat16).at[:, :C].set(
        params["w3"].astype(jnp.bfloat16))
    b3 = jnp.zeros((1, Cp), jnp.float32).at[:, :C].set(
        params["b3"].reshape(1, C).astype(jnp.float32))

    mlp_flops = 2 * Bp * (D * HID1 + HID1 * HID2 + HID2 * Cp)
    weight_bytes = 2 * (D * HID1 + HID1 * HID2 + HID2 * Cp) + 4 * (HID1 + HID2 + Cp)
    out_bytes = 4 * Bp * Cp
    # v7x has 64 MiB VMEM / TensorCore: stay well under ~48 MiB scoped VMEM.
    VMEM_LIMIT = 48 * 1024 * 1024

    if pooling == "onehot":
        if vocab_tile is None:
            vocab_tile = 2048                  # bf16: 1 MiB/tile, double-buffered
        VT = _round_up(min(vocab_tile, V), SUB)
        Vp = _round_up(V, VT)
        emb_p = emb
        if Vp != V:
            emb_p = jnp.concatenate(
                [emb, jnp.zeros((Vp - V, D), emb.dtype)], axis=0)
        n_vt = Vp // VT

        flops = 2 * Bp * Vp * D + mlp_flops
        # Table is re-streamed for every batch tile.
        bytes_accessed = (4 * (ids_p.size + len_col.size)
                          + n_bt * emb_p.size * 2
                          + weight_bytes + out_bytes)
        cost = pl.CostEstimate(flops=int(flops), transcendentals=0,
                               bytes_accessed=int(bytes_accessed))

        out = pl.pallas_call(
            _onehot_kernel,
            out_shape=jax.ShapeDtypeStruct((Bp, Cp), jnp.float32),
            grid_spec=pltpu.PrefetchScalarGridSpec(
                num_scalar_prefetch=0,
                grid=(n_bt, n_vt),
                in_specs=[
                    pl.BlockSpec((batch_tile, Lmax), lambda i, k: (i, 0)),   # ids
                    pl.BlockSpec((batch_tile, 1), lambda i, k: (i, 0)),      # lens
                    pl.BlockSpec((VT, D), lambda i, k: (k, 0)),              # emb
                    pl.BlockSpec((EMB_DIM, HID1), lambda i, k: (0, 0)),      # w1
                    pl.BlockSpec((1, HID1), lambda i, k: (0, 0)),            # b1
                    pl.BlockSpec((HID1, HID2), lambda i, k: (0, 0)),         # w2
                    pl.BlockSpec((1, HID2), lambda i, k: (0, 0)),            # b2
                    pl.BlockSpec((HID2, Cp), lambda i, k: (0, 0)),           # w3
                    pl.BlockSpec((1, Cp), lambda i, k: (0, 0)),              # b3
                ],
                out_specs=pl.BlockSpec((batch_tile, Cp), lambda i, k: (i, 0)),
                scratch_shapes=[
                    pltpu.VMEM((batch_tile, EMB_DIM), jnp.float32),   # pooled acc
                    pltpu.VMEM((batch_tile, Lmax), jnp.int32),        # masked ids
                    pltpu.VMEM((batch_tile, 1), jnp.float32),         # 1/len
                ],
            ),
            compiler_params=pltpu.CompilerParams(
                dimension_semantics=("parallel", "arbitrary"),
                vmem_limit_bytes=VMEM_LIMIT),
            cost_estimate=cost,
        )(ids_p, len_col, emb_p, w1, b1, w2, b2, w3, b3)
        return out[:B, :C]

    # ---- gather path ----
    # TODO(synk): ids live in SMEM via scalar prefetch; for very long token
    # streams (Bp*Lmax large) they should be chunked/staged instead.
    ids_flat = ids_p.reshape(-1)               # (Bp*Lmax,)
    len_flat = len_col.reshape(-1)             # (Bp,)

    flops = Bp * Lmax * D + mlp_flops
    bytes_accessed = (4 * (ids_flat.size + len_flat.size)
                      + 2 * Bp * Lmax * D                 # bf16 gathered rows
                      + weight_bytes + out_bytes)
    cost = pl.CostEstimate(flops=int(flops), transcendentals=0,
                           bytes_accessed=int(bytes_accessed))

    out = pl.pallas_call(
        _gather_kernel,
        out_shape=jax.ShapeDtypeStruct((Bp, Cp), jnp.float32),
        grid_spec=pltpu.PrefetchScalarGridSpec(
            num_scalar_prefetch=2,             # ids_flat, len_flat -> SMEM
            grid=(n_bt,),
            in_specs=[
                pl.BlockSpec(memory_space=pl.ANY),                          # emb (HBM)
                pl.BlockSpec((EMB_DIM, HID1), lambda i, ids, lens: (0, 0)),  # w1
                pl.BlockSpec((1, HID1), lambda i, ids, lens: (0, 0)),        # b1
                pl.BlockSpec((HID1, HID2), lambda i, ids, lens: (0, 0)),     # w2
                pl.BlockSpec((1, HID2), lambda i, ids, lens: (0, 0)),        # b2
                pl.BlockSpec((HID2, Cp), lambda i, ids, lens: (0, 0)),       # w3
                pl.BlockSpec((1, Cp), lambda i, ids, lens: (0, 0)),          # b3
            ],
            out_specs=pl.BlockSpec((batch_tile, Cp), lambda i, ids, lens: (i, 0)),
            scratch_shapes=[
                pltpu.VMEM((2, Lmax, EMB_DIM), emb.dtype),   # double-buffered rows
                pltpu.SemaphoreType.DMA((2, Lmax)),
                pltpu.VMEM((batch_tile, EMB_DIM), jnp.float32),   # pooled bags
            ],
        ),
        compiler_params=pltpu.CompilerParams(
            dimension_semantics=("parallel",),
            vmem_limit_bytes=VMEM_LIMIT),
        cost_estimate=cost,
    )(ids_flat, len_flat, emb, w1, b1, w2, b2, w3, b3)
    return out[:B, :C]


# ----------------------------------------------------------------------------
# Pure-JAX reference (f32) and param init
# ----------------------------------------------------------------------------
def reference_forward(ids, lengths, params):
    B, Lmax = ids.shape
    mask = (jnp.arange(Lmax)[None, :] < lengths[:, None]).astype(jnp.float32)
    gathered = params["emb"][ids]                                   # (B, Lmax, D)
    pooled = (gathered * mask[..., None]).sum(axis=1)
    pooled = pooled / jnp.maximum(lengths, 1)[:, None].astype(jnp.float32)
    h1 = jnp.maximum(pooled @ params["w1"] + params["b1"], 0.0)
    h2 = jnp.maximum(h1 @ params["w2"] + params["b2"], 0.0)
    return h2 @ params["w3"] + params["b3"]


def init_params(key, vocab_size, num_classes):
    ks = jax.random.split(key, 7)
    scale = 0.05
    return {
        "emb": jax.random.normal(ks[0], (vocab_size, EMB_DIM), jnp.float32) * scale,
        "w1": jax.random.normal(ks[1], (EMB_DIM, HID1), jnp.float32) * scale,
        "b1": jax.random.normal(ks[2], (1, HID1), jnp.float32) * scale,
        "w2": jax.random.normal(ks[3], (HID1, HID2), jnp.float32) * scale,
        "b2": jax.random.normal(ks[4], (1, HID2), jnp.float32) * scale,
        "w3": jax.random.normal(ks[5], (HID2, num_classes), jnp.float32) * scale,
        "b3": jax.random.normal(ks[6], (1, num_classes), jnp.float32) * scale,
    }


if __name__ == "__main__":
    B, LMAX, VOCAB, NUM_CLASSES = 8, 16, 64, 8

    key = jax.random.PRNGKey(0)
    k_ids, k_len, k_par = jax.random.split(key, 3)

    ids = jax.random.randint(k_ids, (B, LMAX), 0, VOCAB, dtype=jnp.int32)
    lengths = jax.random.randint(k_len, (B,), 1, LMAX + 1, dtype=jnp.int32)
    params = init_params(k_par, VOCAB, NUM_CLASSES)

    ref = reference_forward(ids, lengths, params)

    # One-hot / MXU pooling path (default for small vocab); vocab_tile=32 forces
    # two vocab tiles, exercising the gridded accumulation.
    logits_oh = text_classification_forward(ids, lengths, params,
                                             vocab_tile=32, pooling="onehot")
    jax.block_until_ready(logits_oh)
    assert logits_oh.shape == (B, NUM_CLASSES)
    assert jnp.allclose(logits_oh, ref, atol=1e-2, rtol=1e-2), (
        "onehot max err", float(jnp.max(jnp.abs(logits_oh - ref))))

    # DMA row-gather pooling path (default for large vocab), forced here to
    # exercise it at small shapes.
    logits_g = text_classification_forward(ids, lengths, params, pooling="gather")
    jax.block_until_ready(logits_g)
    assert logits_g.shape == (B, NUM_CLASSES)
    assert jnp.allclose(logits_g, ref, atol=1e-2, rtol=1e-2), (
        "gather max err", float(jnp.max(jnp.abs(logits_g - ref))))

    print("KERNEL_OK")
</pallas_src>

<mosaic_0001>
module attributes {stable_mosaic.version = 11 : i64} {
  func.func @_onehot_kernel(%arg0: i32, %arg1: i32, %arg2: memref<8x16xi32, #tpu.memory_space<vmem>>, %arg3: memref<8x1xi32, #tpu.memory_space<vmem>>, %arg4: memref<32x256xbf16, #tpu.memory_space<vmem>>, %arg5: memref<256x512xbf16, #tpu.memory_space<vmem>>, %arg6: memref<1x512xf32, #tpu.memory_space<vmem>>, %arg7: memref<512x256xbf16, #tpu.memory_space<vmem>>, %arg8: memref<1x256xf32, #tpu.memory_space<vmem>>, %arg9: memref<256x128xbf16, #tpu.memory_space<vmem>>, %arg10: memref<1x128xf32, #tpu.memory_space<vmem>>, %arg11: memref<8x128xf32, #tpu.memory_space<vmem>>, %arg12: memref<8x256xf32, #tpu.memory_space<vmem>>, %arg13: memref<8x16xi32, #tpu.memory_space<vmem>>, %arg14: memref<8x1xf32, #tpu.memory_space<vmem>>) attributes {dimension_semantics = [#tpu.dimension_semantics<parallel>, #tpu.dimension_semantics<arbitrary>], iteration_bounds = array<i64: 1, 2>, scalar_prefetch = 0 : i64, scratch_operands = 3 : i64, tpu.core_type = #tpu.core_type<tc>, window_params = [{transform_indices = @transform_0, window_bounds = array<i64: 8, 16>}, {transform_indices = @transform_1, window_bounds = array<i64: 8, 1>}, {transform_indices = @transform_2, window_bounds = array<i64: 32, 256>}, {pipeline_mode = #tpu.pipeline_mode<synchronous>, transform_indices = @transform_3, window_bounds = array<i64: 256, 512>}, {pipeline_mode = #tpu.pipeline_mode<synchronous>, transform_indices = @transform_4, window_bounds = array<i64: 1, 512>}, {pipeline_mode = #tpu.pipeline_mode<synchronous>, transform_indices = @transform_5, window_bounds = array<i64: 512, 256>}, {pipeline_mode = #tpu.pipeline_mode<synchronous>, transform_indices = @transform_6, window_bounds = array<i64: 1, 256>}, {pipeline_mode = #tpu.pipeline_mode<synchronous>, transform_indices = @transform_7, window_bounds = array<i64: 256, 128>}, {pipeline_mode = #tpu.pipeline_mode<synchronous>, transform_indices = @transform_8, window_bounds = array<i64: 1, 128>}, {transform_indices = @transform_9, window_bounds = array<i64: 8, 128>}]} {
    %c0_i32 = arith.constant 0 : i32
    %0 = arith.cmpi eq, %arg1, %c0_i32 : i32
    %1 = arith.extui %0 : i1 to i32
    %c0_i32_0 = arith.constant 0 : i32
    %2 = arith.cmpi ne, %1, %c0_i32_0 : i32
    scf.if %2 {
      %cst_11 = arith.constant 0.000000e+00 : f32
      %100 = vector.broadcast %cst_11 : f32 to vector<8x256xf32>
      %c0_12 = arith.constant 0 : index
      %c0_13 = arith.constant 0 : index
      %101 = vector.load %arg12[%c0_12, %c0_13] : memref<8x256xf32, #tpu.memory_space<vmem>>, vector<8x256xf32>
      tpu.vector_store %arg12[%c0_12, %c0_13], %100 {strides = array<i32>} : memref<8x256xf32, #tpu.memory_space<vmem>>, vector<8x256xf32>,
      %c0_14 = arith.constant 0 : index
      %c0_15 = arith.constant 0 : index
      %102 = vector.load %arg3[%c0_14, %c0_15] : memref<8x1xi32, #tpu.memory_space<vmem>>, vector<8x1xi32>
      %c1_i32_16 = arith.constant 1 : i32
      %103 = vector.broadcast %c1_i32_16 : i32 to vector<8x1xi32>
      %104 = arith.maxsi %102, %103 : vector<8x1xi32>
      %105 = arith.sitofp %104 : vector<8x1xi32> to vector<8x1xf32>
      %cst_17 = arith.constant 1.000000e+00 : f32
      %106 = vector.broadcast %cst_17 : f32 to vector<8x1xf32>
      %107 = arith.divf %106, %105 : vector<8x1xf32>
      %c0_18 = arith.constant 0 : index
      %c0_19 = arith.constant 0 : index
      %108 = vector.load %arg14[%c0_18, %c0_19] : memref<8x1xf32, #tpu.memory_space<vmem>>, vector<8x1xf32>
      tpu.vector_store %arg14[%c0_18, %c0_19], %107 {strides = array<i32>} : memref<8x1xf32, #tpu.memory_space<vmem>>, vector<8x1xf32>,
      %109 = tpu.iota {dimensions = array<i32: 1>} : vector<8x16xi32>
      %110 = vector.broadcast %102 : vector<8x1xi32> to vector<8x16xi32>
      %111 = arith.cmpi slt, %109, %110 : vector<8x16xi32>
      %c0_20 = arith.constant 0 : index
      %c0_21 = arith.constant 0 : index
      %112 = vector.load %arg2[%c0_20, %c0_21] : memref<8x16xi32, #tpu.memory_space<vmem>>, vector<8x16xi32>
      %c-1_i32 = arith.constant -1 : i32
      %113 = vector.broadcast %c-1_i32 : i32 to vector<8x16xi32>
      %114 = arith.select %111, %112, %113 : vector<8x16xi1>, vector<8x16xi32>
      %c0_22 = arith.constant 0 : index
      %c0_23 = arith.constant 0 : index
      %115 = vector.load %arg13[%c0_22, %c0_23] : memref<8x16xi32, #tpu.memory_space<vmem>>, vector<8x16xi32>
      tpu.vector_store %arg13[%c0_22, %c0_23], %114 {strides = array<i32>} : memref<8x16xi32, #tpu.memory_space<vmem>>, vector<8x16xi32>,
    } else {
    }
    %c0 = arith.constant 0 : index
    %c0_1 = arith.constant 0 : index
    %3 = vector.load %arg13[%c0, %c0_1] : memref<8x16xi32, #tpu.memory_space<vmem>>, vector<8x16xi32>
    %4 = tpu.iota {dimensions = array<i32: 1>} : vector<8x32xi32>
    %c32_i32 = arith.constant 32 : i32
    %5 = arith.muli %arg1, %c32_i32 : i32
    %6 = vector.broadcast %5 : i32 to vector<8x32xi32>
    %7 = arith.addi %4, %6 : vector<8x32xi32>
    %c0_i32_2 = arith.constant 0 : i32
    %8 = vector.broadcast %c0_i32_2 : i32 to vector<8x32xi32>
    %c0_i32_3 = arith.constant 0 : i32
    %9 = vector.broadcast %c0_i32_3 : i32 to vector<8x32xi32>
    %10 = vector.extract_strided_slice %3 {offsets = [0, 0], sizes = [8, 1], strides = [1, 1]} : vector<8x16xi32> to vector<8x1xi32>
    %11 = vector.broadcast %10 : vector<8x1xi32> to vector<8x32xi32>
    %12 = arith.cmpi eq, %11, %7 : vector<8x32xi32>
    %13 = arith.extui %12 : vector<8x32xi1> to vector<8x32xi32>
    %14 = arith.addi %8, %13 : vector<8x32xi32>
    %15 = vector.extract_strided_slice %3 {offsets = [0, 1], sizes = [8, 1], strides = [1, 1]} : vector<8x16xi32> to vector<8x1xi32>
    %16 = vector.broadcast %15 : vector<8x1xi32> to vector<8x32xi32>
    %17 = arith.cmpi eq, %16, %7 : vector<8x32xi32>
    %18 = arith.extui %17 : vector<8x32xi1> to vector<8x32xi32>
    %19 = arith.addi %9, %18 : vector<8x32xi32>
    %20 = vector.extract_strided_slice %3 {offsets = [0, 2], sizes = [8, 1], strides = [1, 1]} : vector<8x16xi32> to vector<8x1xi32>
    %21 = vector.broadcast %20 : vector<8x1xi32> to vector<8x32xi32>
    %22 = arith.cmpi eq, %21, %7 : vector<8x32xi32>
    %23 = arith.extui %22 : vector<8x32xi1> to vector<8x32xi32>
    %24 = arith.addi %14, %23 : vector<8x32xi32>
    %25 = vector.extract_strided_slice %3 {offsets = [0, 3], sizes = [8, 1], strides = [1, 1]} : vector<8x16xi32> to vector<8x1xi32>
    %26 = vector.broadcast %25 : vector<8x1xi32> to vector<8x32xi32>
    %27 = arith.cmpi eq, %26, %7 : vector<8x32xi32>
    %28 = arith.extui %27 : vector<8x32xi1> to vector<8x32xi32>
    %29 = arith.addi %19, %28 : vector<8x32xi32>
    %30 = vector.extract_strided_slice %3 {offsets = [0, 4], sizes = [8, 1], strides = [1, 1]} : vector<8x16xi32> to vector<8x1xi32>
    %31 = vector.broadcast %30 : vector<8x1xi32> to vector<8x32xi32>
    %32 = arith.cmpi eq, %31, %7 : vector<8x32xi32>
    %33 = arith.extui %32 : vector<8x32xi1> to vector<8x32xi32>
    %34 = arith.addi %24, %33 : vector<8x32xi32>
    %35 = vector.extract_strided_slice %3 {offsets = [0, 5], sizes = [8, 1], strides = [1, 1]} : vector<8x16xi32> to vector<8x1xi32>
    %36 = vector.broadcast %35 : vector<8x1xi32> to vector<8x32xi32>
    %37 = arith.cmpi eq, %36, %7 : vector<8x32xi32>
    %38 = arith.extui %37 : vector<8x32xi1> to vector<8x32xi32>
    %39 = arith.addi %29, %38 : vector<8x32xi32>
    %40 = vector.extract_strided_slice %3 {offsets = [0, 6], sizes = [8, 1], strides = [1, 1]} : vector<8x16xi32> to vector<8x1xi32>
    %41 = vector.broadcast %40 : vector<8x1xi32> to vector<8x32xi32>
    %42 = arith.cmpi eq, %41, %7 : vector<8x32xi32>
    %43 = arith.extui %42 : vector<8x32xi1> to vector<8x32xi32>
    %44 = arith.addi %34, %43 : vector<8x32xi32>
    %45 = vector.extract_strided_slice %3 {offsets = [0, 7], sizes = [8, 1], strides = [1, 1]} : vector<8x16xi32> to vector<8x1xi32>
    %46 = vector.broadcast %45 : vector<8x1xi32> to vector<8x32xi32>
    %47 = arith.cmpi eq, %46, %7 : vector<8x32xi32>
    %48 = arith.extui %47 : vector<8x32xi1> to vector<8x32xi32>
    %49 = arith.addi %39, %48 : vector<8x32xi32>
    %50 = vector.extract_strided_slice %3 {offsets = [0, 8], sizes = [8, 1], strides = [1, 1]} : vector<8x16xi32> to vector<8x1xi32>
    %51 = vector.broadcast %50 : vector<8x1xi32> to vector<8x32xi32>
    %52 = arith.cmpi eq, %51, %7 : vector<8x32xi32>
    %53 = arith.extui %52 : vector<8x32xi1> to vector<8x32xi32>
    %54 = arith.addi %44, %53 : vector<8x32xi32>
    %55 = vector.extract_strided_slice %3 {offsets = [0, 9], sizes = [8, 1], strides = [1, 1]} : vector<8x16xi32> to vector<8x1xi32>
    %56 = vector.broadcast %55 : vector<8x1xi32> to vector<8x32xi32>
    %57 = arith.cmpi eq, %56, %7 : vector<8x32xi32>
    %58 = arith.extui %57 : vector<8x32xi1> to vector<8x32xi32>
    %59 = arith.addi %49, %58 : vector<8x32xi32>
    %60 = vector.extract_strided_slice %3 {offsets = [0, 10], sizes = [8, 1], strides = [1, 1]} : vector<8x16xi32> to vector<8x1xi32>
    %61 = vector.broadcast %60 : vector<8x1xi32> to vector<8x32xi32>
    %62 = arith.cmpi eq, %61, %7 : vector<8x32xi32>
    %63 = arith.extui %62 : vector<8x32xi1> to vector<8x32xi32>
    %64 = arith.addi %54, %63 : vector<8x32xi32>
    %65 = vector.extract_strided_slice %3 {offsets = [0, 11], sizes = [8, 1], strides = [1, 1]} : vector<8x16xi32> to vector<8x1xi32>
    %66 = vector.broadcast %65 : vector<8x1xi32> to vector<8x32xi32>
    %67 = arith.cmpi eq, %66, %7 : vector<8x32xi32>
    %68 = arith.extui %67 : vector<8x32xi1> to vector<8x32xi32>
    %69 = arith.addi %59, %68 : vector<8x32xi32>
    %70 = vector.extract_strided_slice %3 {offsets = [0, 12], sizes = [8, 1], strides = [1, 1]} : vector<8x16xi32> to vector<8x1xi32>
    %71 = vector.broadcast %70 : vector<8x1xi32> to vector<8x32xi32>
    %72 = arith.cmpi eq, %71, %7 : vector<8x32xi32>
    %73 = arith.extui %72 : vector<8x32xi1> to vector<8x32xi32>
    %74 = arith.addi %64, %73 : vector<8x32xi32>
    %75 = vector.extract_strided_slice %3 {offsets = [0, 13], sizes = [8, 1], strides = [1, 1]} : vector<8x16xi32> to vector<8x1xi32>
    %76 = vector.broadcast %75 : vector<8x1xi32> to vector<8x32xi32>
    %77 = arith.cmpi eq, %76, %7 : vector<8x32xi32>
    %78 = arith.extui %77 : vector<8x32xi1> to vector<8x32xi32>
    %79 = arith.addi %69, %78 : vector<8x32xi32>
    %80 = vector.extract_strided_slice %3 {offsets = [0, 14], sizes = [8, 1], strides = [1, 1]} : vector<8x16xi32> to vector<8x1xi32>
    %81 = vector.broadcast %80 : vector<8x1xi32> to vector<8x32xi32>
    %82 = arith.cmpi eq, %81, %7 : vector<8x32xi32>
    %83 = arith.extui %82 : vector<8x32xi1> to vector<8x32xi32>
    %84 = arith.addi %74, %83 : vector<8x32xi32>
    %85 = vector.extract_strided_slice %3 {offsets = [0, 15], sizes = [8, 1], strides = [1, 1]} : vector<8x16xi32> to vector<8x1xi32>
    %86 = vector.broadcast %85 : vector<8x1xi32> to vector<8x32xi32>
    %87 = arith.cmpi eq, %86, %7 : vector<8x32xi32>
    %88 = arith.extui %87 : vector<8x32xi1> to vector<8x32xi32>
    %89 = arith.addi %79, %88 : vector<8x32xi32>
    %90 = arith.addi %84, %89 : vector<8x32xi32>
    %c0_4 = arith.constant 0 : index
    %c0_5 = arith.constant 0 : index
    %91 = vector.load %arg12[%c0_4, %c0_5] : memref<8x256xf32, #tpu.memory_space<vmem>>, vector<8x256xf32>
    %92 = arith.sitofp %90 : vector<8x32xi32> to vector<8x32xbf16>
    %c0_6 = arith.constant 0 : index
    %c0_7 = arith.constant 0 : index
    %93 = vector.load %arg4[%c0_6, %c0_7] : memref<32x256xbf16, #tpu.memory_space<vmem>>, vector<32x256xbf16>
    %cst = arith.constant dense<0.000000e+00> : vector<8x256xf32>
    %94 = tpu.matmul %92, %93, %cst {dimension_numbers = #tpu.dot_dimension_numbers<[1], [0], [0], [1], [0, 0, 1, 1], [], []>} : vector<8x32xbf16>, vector<32x256xbf16>, vector<8x256xf32> -> vector<8x256xf32>
    %95 = arith.addf %91, %94 : vector<8x256xf32>
    %c0_8 = arith.constant 0 : index
    %c0_9 = arith.constant 0 : index
    %96 = vector.load %arg12[%c0_8, %c0_9] : memref<8x256xf32, #tpu.memory_space<vmem>>, vector<8x256xf32>
    tpu.vector_store %arg12[%c0_8, %c0_9], %95 {strides = array<i32>} : memref<8x256xf32, #tpu.memory_space<vmem>>, vector<8x256xf32>,
    %c1_i32 = arith.constant 1 : i32
    %97 = arith.cmpi eq, %arg1, %c1_i32 : i32
    %98 = arith.extui %97 : i1 to i32
    %c0_i32_10 = arith.constant 0 : i32
    %99 = arith.cmpi ne, %98, %c0_i32_10 : i32
    scf.if %99 {
      %c0_11 = arith.constant 0 : index
      %c0_12 = arith.constant 0 : index
      %100 = vector.load %arg12[%c0_11, %c0_12] : memref<8x256xf32, #tpu.memory_space<vmem>>, vector<8x256xf32>
      %c0_13 = arith.constant 0 : index
      %c0_14 = arith.constant 0 : index
      %101 = vector.load %arg14[%c0_13, %c0_14] : memref<8x1xf32, #tpu.memory_space<vmem>>, vector<8x1xf32>
      %102 = vector.broadcast %101 : vector<8x1xf32> to vector<8x256xf32>
      %103 = arith.mulf %100, %102 : vector<8x256xf32>
      %104 = arith.truncf %103 : vector<8x256xf32> to vector<8x256xbf16>
      %c0_15 = arith.constant 0 : index
      %c0_16 = arith.constant 0 : index
      %105 = vector.load %arg5[%c0_15, %c0_16] : memref<256x512xbf16, #tpu.memory_space<vmem>>, vector<256x512xbf16>
      %cst_17 = arith.constant dense<0.000000e+00> : vector<8x512xf32>
      %106 = tpu.matmul %104, %105, %cst_17 {dimension_numbers = #tpu.dot_dimension_numbers<[1], [0], [0], [1], [0, 0, 1, 1], [], []>} : vector<8x256xbf16>, vector<256x512xbf16>, vector<8x512xf32> -> vector<8x512xf32>
      %c0_18 = arith.constant 0 : index
      %c0_19 = arith.constant 0 : index
      %107 = vector.load %arg6[%c0_18, %c0_19] : memref<1x512xf32, #tpu.memory_space<vmem>>, vector<1x512xf32>
      %108 = vector.broadcast %107 : vector<1x512xf32> to vector<8x512xf32>
      %109 = arith.addf %106, %108 : vector<8x512xf32>
      %cst_20 = arith.constant 0.000000e+00 : f32
      %110 = vector.broadcast %cst_20 : f32 to vector<8x512xf32>
      %111 = arith.maximumf %109, %110 : vector<8x512xf32>
      %112 = arith.truncf %111 : vector<8x512xf32> to vector<8x512xbf16>
      %c0_21 = arith.constant 0 : index
      %c0_22 = arith.constant 0 : index
      %113 = vector.load %arg7[%c0_21, %c0_22] : memref<512x256xbf16, #tpu.memory_space<vmem>>, vector<512x256xbf16>
      %cst_23 = arith.constant dense<0.000000e+00> : vector<8x256xf32>
      %114 = tpu.matmul %112, %113, %cst_23 {dimension_numbers = #tpu.dot_dimension_numbers<[1], [0], [0], [1], [0, 0, 1, 1], [], []>} : vector<8x512xbf16>, vector<512x256xbf16>, vector<8x256xf32> -> vector<8x256xf32>
      %c0_24 = arith.constant 0 : index
      %c0_25 = arith.constant 0 : index
      %115 = vector.load %arg8[%c0_24, %c0_25] : memref<1x256xf32, #tpu.memory_space<vmem>>, vector<1x256xf32>
      %116 = vector.broadcast %115 : vector<1x256xf32> to vector<8x256xf32>
      %117 = arith.addf %114, %116 : vector<8x256xf32>
      %cst_26 = arith.constant 0.000000e+00 : f32
      %118 = vector.broadcast %cst_26 : f32 to vector<8x256xf32>
      %119 = arith.maximumf %117, %118 : vector<8x256xf32>
      %120 = arith.truncf %119 : vector<8x256xf32> to vector<8x256xbf16>
      %c0_27 = arith.constant 0 : index
      %c0_28 = arith.constant 0 : index
      %121 = vector.load %arg9[%c0_27, %c0_28] : memref<256x128xbf16, #tpu.memory_space<vmem>>, vector<256x128xbf16>
      %cst_29 = arith.constant dense<0.000000e+00> : vector<8x128xf32>
      %122 = tpu.matmul %120, %121, %cst_29 {dimension_numbers = #tpu.dot_dimension_numbers<[1], [0], [0], [1], [0, 0, 1, 1], [], []>} : vector<8x256xbf16>, vector<256x128xbf16>, vector<8x128xf32> -> vector<8x128xf32>
      %c0_30 = arith.constant 0 : index
      %c0_31 = arith.constant 0 : index
      %123 = vector.load %arg10[%c0_30, %c0_31] : memref<1x128xf32, #tpu.memory_space<vmem>>, vector<1x128xf32>
      %124 = vector.broadcast %123 : vector<1x128xf32> to vector<8x128xf32>
      %125 = arith.addf %122, %124 : vector<8x128xf32>
      %c0_32 = arith.constant 0 : index
      %c0_33 = arith.constant 0 : index
      %126 = vector.load %arg11[%c0_32, %c0_33] : memref<8x128xf32, #tpu.memory_space<vmem>>, vector<8x128xf32>
      tpu.vector_store %arg11[%c0_32, %c0_33], %125 {strides = array<i32>} : memref<8x128xf32, #tpu.memory_space<vmem>>, vector<8x128xf32>,
    } else {
    }
    return
  }
  func.func @transform_0(%arg0: i32, %arg1: i32) -> (i32, i32) {
    %c0_i32 = arith.constant 0 : i32
    %c0_i32_0 = arith.constant 0 : i32
    return %arg0, %c0_i32 : i32, i32
  }
  func.func @transform_1(%arg0: i32, %arg1: i32) -> (i32, i32) {
    %c0_i32 = arith.constant 0 : i32
    %c0_i32_0 = arith.constant 0 : i32
    return %arg0, %c0_i32 : i32, i32
  }
  func.func @transform_2(%arg0: i32, %arg1: i32) -> (i32, i32) {
    %c0_i32 = arith.constant 0 : i32
    %c0_i32_0 = arith.constant 0 : i32
    return %arg1, %c0_i32 : i32, i32
  }
  func.func @transform_3(%arg0: i32, %arg1: i32) -> (i32, i32) {
    %c0_i32 = arith.constant 0 : i32
    %c0_i32_0 = arith.constant 0 : i32
    %c0_i32_1 = arith.constant 0 : i32
    return %c0_i32, %c0_i32_0 : i32, i32
  }
  func.func @transform_4(%arg0: i32, %arg1: i32) -> (i32, i32) {
    %c0_i32 = arith.constant 0 : i32
    %c0_i32_0 = arith.constant 0 : i32
    %c0_i32_1 = arith.constant 0 : i32
    return %c0_i32, %c0_i32_0 : i32, i32
  }
  func.func @transform_5(%arg0: i32, %arg1: i32) -> (i32, i32) {
    %c0_i32 = arith.constant 0 : i32
    %c0_i32_0 = arith.constant 0 : i32
    %c0_i32_1 = arith.constant 0 : i32
    return %c0_i32, %c0_i32_0 : i32, i32
  }
  func.func @transform_6(%arg0: i32, %arg1: i32) -> (i32, i32) {
    %c0_i32 = arith.constant 0 : i32
    %c0_i32_0 = arith.constant 0 : i32
    %c0_i32_1 = arith.constant 0 : i32
    return %c0_i32, %c0_i32_0 : i32, i32
  }
  func.func @transform_7(%arg0: i32, %arg1: i32) -> (i32, i32) {
    %c0_i32 = arith.constant 0 : i32
    %c0_i32_0 = arith.constant 0 : i32
    %c0_i32_1 = arith.constant 0 : i32
    return %c0_i32, %c0_i32_0 : i32, i32
  }
  func.func @transform_8(%arg0: i32, %arg1: i32) -> (i32, i32) {
    %c0_i32 = arith.constant 0 : i32
    %c0_i32_0 = arith.constant 0 : i32
    %c0_i32_1 = arith.constant 0 : i32
    return %c0_i32, %c0_i32_0 : i32, i32
  }
  func.func @transform_9(%arg0: i32, %arg1: i32) -> (i32, i32) {
    %c0_i32 = arith.constant 0 : i32
    %c0_i32_0 = arith.constant 0 : i32
    return %arg0, %c0_i32 : i32, i32
  }
}

</mosaic_0001>

<llo_original>
// kernel: tpu_custom_call.1
$region0: #{tpu_custom_call.1}
  #allocation0 [shape = 'u32[]', space=smem, size = 0x4, offset = 0x4, fixed_abs, tag = 'smem constant byte address 0x4 - core index']
  #allocation1 [shape = 'u32[72,128]{1,0:T(1,128)}', space=vmem, size = 0x9000, scoped, tag = 'internal scratch']
  #allocation2 [shape = 'f32[8,256]{1,0:T(8,128)}', space=vmem, size = 0x2000, scoped, tag = 'scratch operand']
  #allocation3 [shape = 's32[8,16]{1,0:T(8,128)}', space=vmem, size = 0x1000, scoped, tag = 'scratch operand']
  #allocation4 [shape = 'f32[8,1]{1,0:T(8,128)}', space=vmem, size = 0x1000, scoped, tag = 'scratch operand']
  %s0 = inlined_call_operand.vmem [shape: s32[8,16], index: 0, kind: input, shape index: {}]
  %s1 = inlined_call_operand.vmem [shape: s32[8,1], index: 1, kind: input, shape index: {}]
  %s2 = inlined_call_operand.hbm [shape: bf16[64,256], index: 2, kind: input, shape index: {}]
  %s3 = inlined_call_operand.hbm [shape: bf16[256,512], index: 3, kind: input, shape index: {}]
  %s4 = inlined_call_operand.vmem [shape: f32[1,512], index: 4, kind: input, shape index: {}]
  %s5 = inlined_call_operand.hbm [shape: bf16[512,256], index: 5, kind: input, shape index: {}]
  %s6 = inlined_call_operand.vmem [shape: f32[1,256], index: 6, kind: input, shape index: {}]
  %s7 = inlined_call_operand.hbm [shape: bf16[256,128], index: 7, kind: input, shape index: {}]
  %s8 = inlined_call_operand.vmem [shape: f32[1,128], index: 8, kind: input, shape index: {}]
  %s9 = inlined_call_operand.hbm [shape: f32[8,128], index: 9, kind: output, shape index: {}]
  %s10 = sld [smem:[#allocation0]]
  $region93: #{tpu_custom_call.1} parent=0
    _
  %s12 = ssub.s32 1, %s10
  %s13 = scalar_select 0, %s12, %s10
  $region1: #{tpu_custom_call.1} parent=0
    #allocation5 [shape = 'u8[32768]{0}', space=vmem, size = 0x8000, scoped, tag = 'input window, operand 2']
    #allocation6 [shape = 's32[2]{0}', space=sflag, size = 0x8, scoped, tag = 'scoped memory for tpu_custom_call.1']
    #allocation7 [shape = 's32[2]{0}', space=sflag, size = 0x8, scoped, tag = 'scoped memory for tpu_custom_call.1']
    #allocation8 [shape = 'u8[262144]{0}', space=vmem, size = 0x40000, scoped, tag = 'input window, operand 3, single buffered']
    #allocation9 [shape = 's32[1]{0}', space=sflag, size = 0x4, scoped, tag = 'scoped memory for tpu_custom_call.1']
    #allocation10 [shape = 'u8[262144]{0}', space=vmem, size = 0x40000, scoped, tag = 'input window, operand 5, single buffered']
    #allocation11 [shape = 'u8[65536]{0}', space=vmem, size = 0x10000, scoped, tag = 'input window, operand 7, single buffered']
    #allocation12 [shape = 's32[1]{0}', space=sflag, size = 0x4, scoped, tag = 'scoped memory for tpu_custom_call.1']
    #allocation13 [shape = 'u8[4096]{0}', space=vmem, size = 0x1000, scoped, tag = 'output window, operand 0, single buffered']
    %14 = vsyncpa [#allocation6], 0
    %s15 = scalar_lea.sflag [#allocation6], 1
    %16 = vsyncpa %s15, 0
    %17 = vsyncpa [#allocation9], 0
    %18 = vsyncpa [#allocation12], 0
    %19 = vsyncpa [#allocation7], 0
    loop: start=0, step=1, limit=4
    $region2: #{tpu_custom_call.1} parent=1 // loop_pre_header
      _
    $region3: #{tpu_custom_call.1} parent=1 // loop_header
      %s21 = sphi 0, %s25
      %p22 = scmp.ge.s32.totalorder %s21, 4
      %s28 = sphi 0, %s40
      %s29 = sphi 0, %s36
      %s30 = sphi 0, %s28
      %s31 = sphi 0, %s29
      %s32 = sphi 0, %s30
      %s33 = sphi 0, %s31
      %s43 = sphi 0, %s45
      %s46 = sphi 0, %s43
      %s47 = sphi 0, %s46
      %s63 = sphi 0, %s47
      %s69 = sphi 0, %s71
      %s72 = sphi 0, %s69
      %s73 = sphi 0, %s72
      %s89 = sphi 0, %s73
      %s95 = sphi 0, %s97
      %s98 = sphi 0, %s95
      %s99 = sphi 0, %s98
      %s115 = sphi 0, %s99
      %s119 = sphi 0, %s119
      %s121 = sphi 0, %s119
      %s122 = sphi 0, %s121
      %s136 = sphi 0, %s122
      %s140 = sphi 0, %s140
      %s142 = sphi 0, %s140
      %s143 = sphi 0, %s142
      %s157 = sphi 0, %s143
      %s161 = sphi 0, %s161
      %s163 = sphi 0, %s161
      %s164 = sphi 0, %s163
      %s178 = sphi 0, %s164
      %s182 = sphi 0, %s182
      %s184 = sphi 0, %s182
      %s185 = sphi 0, %s184
      %s199 = sphi 0, %s185
      %s203 = sphi 0, %s203
      %s205 = sphi 0, %s203
      %s206 = sphi 0, %s205
      %s220 = sphi 0, %s206
      %s224 = sphi 0, %s224
      %s226 = sphi 0, %s224
      %s227 = sphi 0, %s226
      %s241 = sphi 0, %s227
      %s247 = sphi 0, %s249
      %s250 = sphi 0, %s247
      %s251 = sphi 0, %s250
      %s267 = sphi 0, %s251
    $region4: #{tpu_custom_call.1} parent=1 // loop_header_branch
      %24 = sbr.rel (%p22) target = $region8
    $region5: #{tpu_custom_call.1} parent=1 // loop_body
      %s26 = ssub.s32 %s21, 1
      %s27 = ssub.s32 %s21, 2
      %s34 = sadd.s32 1, %s29
      %p35 = scmp.ge.s32.totalorder %s34, 2
      %s36 = scalar_select %p35, 0, %s34
      %s37 = sadd.s32 1, %s28
      %s38 = scalar_select %p35, %s37, %s28
      %p39 = scmp.ge.s32.totalorder %s38, 1
      %s40 = scalar_select %p39, 0, %s38
      %s41 = ssub.s32 %s28, %s40
      %p42 = scmp.eq.s32.totalorder %s41, 0
      %s44 = sadd.s32 %s43, 1
      %s45 = scalar_select %p42, %s43, %s44
      %p48 = pneg %p42
      %p49 = scmp.eq.s32.totalorder %s21, 1
      %p50 = por %p48, %p49
      %p51 = scmp.ne.s32.totalorder %s43, %s46
      %p52 = scmp.eq.s32.totalorder %s21, 0
      %p53 = por %p51, %p52
      %p54 = scmp.ne.s32.totalorder %s43, %s46
      %p55 = scmp.eq.s32.totalorder %s26, 1
      %p56 = por %p54, %p55
      %p57 = scmp.ne.s32.totalorder %s46, %s47
      %p58 = scmp.eq.s32.totalorder %s26, 0
      %p59 = por %p57, %p58
      %p60 = scmp.ne.s32.totalorder %s46, %s47
      %p61 = scmp.eq.s32.totalorder %s27, 1
      %p62 = por %p60, %p61
      %p64 = scmp.ne.s32.totalorder %s47, %s63
      %p65 = scmp.eq.s32.totalorder %s27, 0
      %p66 = por %p64, %p65
      %s67 = ssub.s32 %s28, %s40
      %p68 = scmp.eq.s32.totalorder %s67, 0
      %s70 = sadd.s32 %s69, 1
      %s71 = scalar_select %p68, %s69, %s70
      %p74 = pneg %p68
      %p75 = scmp.eq.s32.totalorder %s21, 1
      %p76 = por %p74, %p75
      %p77 = scmp.ne.s32.totalorder %s69, %s72
      %p78 = scmp.eq.s32.totalorder %s21, 0
      %p79 = por %p77, %p78
      %p80 = scmp.ne.s32.totalorder %s69, %s72
      %p81 = scmp.eq.s32.totalorder %s26, 1
      %p82 = por %p80, %p81
      %p83 = scmp.ne.s32.totalorder %s72, %s73
      %p84 = scmp.eq.s32.totalorder %s26, 0
      %p85 = por %p83, %p84
      %p86 = scmp.ne.s32.totalorder %s72, %s73
      %p87 = scmp.eq.s32.totalorder %s27, 1
      %p88 = por %p86, %p87
      %p90 = scmp.ne.s32.totalorder %s73, %s89
      %p91 = scmp.eq.s32.totalorder %s27, 0
      %p92 = por %p90, %p91
      %s93 = ssub.s32 %s29, %s36
      %p94 = scmp.eq.s32.totalorder %s93, 0
      %s96 = sadd.s32 %s95, 1
      %s97 = scalar_select %p94, %s95, %s96
      %p100 = pneg %p94
      %p101 = scmp.eq.s32.totalorder %s21, 1
      %p102 = por %p100, %p101
      %p103 = scmp.ne.s32.totalorder %s95, %s98
      %p104 = scmp.eq.s32.totalorder %s21, 0
      %p105 = por %p103, %p104
      %p106 = scmp.ne.s32.totalorder %s95, %s98
      %p107 = scmp.eq.s32.totalorder %s26, 1
      %p108 = por %p106, %p107
      %p109 = scmp.ne.s32.totalorder %s98, %s99
      %p110 = scmp.eq.s32.totalorder %s26, 0
      %p111 = por %p109, %p110
      %p112 = scmp.ne.s32.totalorder %s98, %s99
      %p113 = scmp.eq.s32.totalorder %s27, 1
      %p114 = por %p112, %p113
      %p116 = scmp.ne.s32.totalorder %s99, %s115
      %p117 = scmp.eq.s32.totalorder %s27, 0
      %p118 = por %p116, %p117
      %s120 = sadd.s32 %s119, 1
      %p123 = scmp.eq.s32.totalorder %s21, 1
      %p124 = scmp.ne.s32.totalorder %s119, %s121
      %p125 = scmp.eq.s32.totalorder %s21, 0
      %p126 = por %p124, %p125
      %p127 = scmp.ne.s32.totalorder %s119, %s121
      %p128 = scmp.eq.s32.totalorder %s26, 1
      %p129 = por %p127, %p128
      %p130 = scmp.ne.s32.totalorder %s121, %s122
      %p131 = scmp.eq.s32.totalorder %s26, 0
      %p132 = por %p130, %p131
      %p133 = scmp.ne.s32.totalorder %s121, %s122
      %p134 = scmp.eq.s32.totalorder %s27, 1
      %p135 = por %p133, %p134
      %p137 = scmp.ne.s32.totalorder %s122, %s136
      %p138 = scmp.eq.s32.totalorder %s27, 0
      %p139 = por %p137, %p138
      %s141 = sadd.s32 %s140, 1
      %p144 = scmp.eq.s32.totalorder %s21, 1
      %p145 = scmp.ne.s32.totalorder %s140, %s142
      %p146 = scmp.eq.s32.totalorder %s21, 0
      %p147 = por %p145, %p146
      %p148 = scmp.ne.s32.totalorder %s140, %s142
      %p149 = scmp.eq.s32.totalorder %s26, 1
      %p150 = por %p148, %p149
      %p151 = scmp.ne.s32.totalorder %s142, %s143
      %p152 = scmp.eq.s32.totalorder %s26, 0
      %p153 = por %p151, %p152
      %p154 = scmp.ne.s32.totalorder %s142, %s143
      %p155 = scmp.eq.s32.totalorder %s27, 1
      %p156 = por %p154, %p155
      %p158 = scmp.ne.s32.totalorder %s143, %s157
      %p159 = scmp.eq.s32.totalorder %s27, 0
      %p160 = por %p158, %p159
      %s162 = sadd.s32 %s161, 1
      %p165 = scmp.eq.s32.totalorder %s21, 1
      %p166 = scmp.ne.s32.totalorder %s161, %s163
      %p167 = scmp.eq.s32.totalorder %s21, 0
      %p168 = por %p166, %p167
      %p169 = scmp.ne.s32.totalorder %s161, %s163
      %p170 = scmp.eq.s32.totalorder %s26, 1
      %p171 = por %p169, %p170
      %p172 = scmp.ne.s32.totalorder %s163, %s164
      %p173 = scmp.eq.s32.totalorder %s26, 0
      %p174 = por %p172, %p173
      %p175 = scmp.ne.s32.totalorder %s163, %s164
      %p176 = scmp.eq.s32.totalorder %s27, 1
      %p177 = por %p175, %p176
      %p179 = scmp.ne.s32.totalorder %s164, %s178
      %p180 = scmp.eq.s32.totalorder %s27, 0
      %p181 = por %p179, %p180
      %s183 = sadd.s32 %s182, 1
      %p186 = scmp.eq.s32.totalorder %s21, 1
      %p187 = scmp.ne.s32.totalorder %s182, %s184
      %p188 = scmp.eq.s32.totalorder %s21, 0
      %p189 = por %p187, %p188
      %p190 = scmp.ne.s32.totalorder %s182, %s184
      %p191 = scmp.eq.s32.totalorder %s26, 1
      %p192 = por %p190, %p191
      %p193 = scmp.ne.s32.totalorder %s184, %s185
      %p194 = scmp.eq.s32.totalorder %s26, 0
      %p195 = por %p193, %p194
      %p196 = scmp.ne.s32.totalorder %s184, %s185
      %p197 = scmp.eq.s32.totalorder %s27, 1
      %p198 = por %p196, %p197
      %p200 = scmp.ne.s32.totalorder %s185, %s199
      %p201 = scmp.eq.s32.totalorder %s27, 0
      %p202 = por %p200, %p201
      %s204 = sadd.s32 %s203, 1
      %p207 = scmp.eq.s32.totalorder %s21, 1
      %p208 = scmp.ne.s32.totalorder %s203, %s205
      %p209 = scmp.eq.s32.totalorder %s21, 0
      %p210 = por %p208, %p209
      %p211 = scmp.ne.s32.totalorder %s203, %s205
      %p212 = scmp.eq.s32.totalorder %s26, 1
      %p213 = por %p211, %p212
      %p214 = scmp.ne.s32.totalorder %s205, %s206
      %p215 = scmp.eq.s32.totalorder %s26, 0
      %p216 = por %p214, %p215
      %p217 = scmp.ne.s32.totalorder %s205, %s206
      %p218 = scmp.eq.s32.totalorder %s27, 1
      %p219 = por %p217, %p218
      %p221 = scmp.ne.s32.totalorder %s206, %s220
      %p222 = scmp.eq.s32.totalorder %s27, 0
      %p223 = por %p221, %p222
      %s225 = sadd.s32 %s224, 1
      %p228 = scmp.eq.s32.totalorder %s21, 1
      %p229 = scmp.ne.s32.totalorder %s224, %s226
      %p230 = scmp.eq.s32.totalorder %s21, 0
      %p231 = por %p229, %p230
      %p232 = scmp.ne.s32.totalorder %s224, %s226
      %p233 = scmp.eq.s32.totalorder %s26, 1
      %p234 = por %p232, %p233
      %p235 = scmp.ne.s32.totalorder %s226, %s227
      %p236 = scmp.eq.s32.totalorder %s26, 0
      %p237 = por %p235, %p236
      %p238 = scmp.ne.s32.totalorder %s226, %s227
      %p239 = scmp.eq.s32.totalorder %s27, 1
      %p240 = por %p238, %p239
      %p242 = scmp.ne.s32.totalorder %s227, %s241
      %p243 = scmp.eq.s32.totalorder %s27, 0
      %p244 = por %p242, %p243
      %s245 = ssub.s32 %s28, %s40
      %p246 = scmp.eq.s32.totalorder %s245, 0
      %s248 = sadd.s32 %s247, 1
      %s249 = scalar_select %p246, %s247, %s248
      %p252 = pneg %p246
      %p253 = scmp.eq.s32.totalorder %s21, 1
      %p254 = por %p252, %p253
      %p255 = scmp.ne.s32.totalorder %s247, %s250
      %p256 = scmp.eq.s32.totalorder %s21, 0
      %p257 = por %p255, %p256
      %p258 = scmp.ne.s32.totalorder %s247, %s250
      %p259 = scmp.eq.s32.totalorder %s26, 1
      %p260 = por %p258, %p259
      %p261 = scmp.ne.s32.totalorder %s250, %s251
      %p262 = scmp.eq.s32.totalorder %s26, 0
      %p263 = por %p261, %p262
      %p264 = scmp.ne.s32.totalorder %s250, %s251
      %p265 = scmp.eq.s32.totalorder %s27, 1
      %p266 = por %p264, %p265
      %p268 = scmp.ne.s32.totalorder %s251, %s267
      %p269 = scmp.eq.s32.totalorder %s27, 0
      %p270 = por %p268, %p269
      %p271 = scmp.le.s32.totalorder 1, %s21
      %p272 = scmp.lt.s32.totalorder %s21, 3
      %p273 = pnand %p271, %p272
      %p274 = pneg %p273
      // Predicated region
      $region9: #{tpu_custom_call.1} parent=5 // pred_check
        _
      $region10: #{tpu_custom_call.1} parent=5 // pred_check_branch
        %276 = sbr.rel (%p273) target = $region12
      $region11: #{tpu_custom_call.1} parent=5 // pred_region
        %s277 = ssub.s32 %s21, 1
        // Predicated region
        $region13: #{tpu_custom_call.1} parent=11 // pred_check
          %p278 = pneg %p59
        $region14: #{tpu_custom_call.1} parent=11 // pred_check_branch
          %280 = sbr.rel (%p278) target = $region16
        $region15: #{tpu_custom_call.1} parent=11 // pred_region
          %p281 = scmp.lt.s32.totalorder %s30, 0
          %s282 = scalar_select %p281, %s30, 0
          %s283 = smul.addr %s282, 8
          %s284 = scalar_lea.vmem %s0, %s283
        $region16: #{tpu_custom_call.1} parent=11 // pred_fallthru
          _
        // Predicated region
        $region17: #{tpu_custom_call.1} parent=11 // pred_check
          %p285 = pneg %p85
        $region18: #{tpu_custom_call.1} parent=11 // pred_check_branch
          %287 = sbr.rel (%p285) target = $region20
        $region19: #{tpu_custom_call.1} parent=11 // pred_region
          %p288 = scmp.lt.s32.totalorder %s30, 0
          %s289 = scalar_select %p288, %s30, 0
          %s290 = smul.addr %s289, 8
          %s291 = scalar_lea.vmem %s1, %s290
        $region20: #{tpu_custom_call.1} parent=11 // pred_fallthru
          _
        // Predicated region
        $region21: #{tpu_custom_call.1} parent=11 // pred_check
          %p292 = pneg %p132
        $region22: #{tpu_custom_call.1} parent=11 // pred_check_branch
          %294 = sbr.rel (%p292) target = $region24
        $region23: #{tpu_custom_call.1} parent=11 // pred_region
          %296 = vsyncadd [#allocation9], 0
          %s297 = sshll.u32 %s3, 4
          %s298 = int_to_ptr.hbm [resolvable:$true] %s297
          %s299 = sshll.u32 [#allocation8], 4
          %s300 = int_to_ptr.vmem [resolvable:$true] %s299
          %305 = dma.hbm_to_vmem [thread:$0]  %s298, 8192, %s300, [#allocation9], 256, 256, 16
        $region24: #{tpu_custom_call.1} parent=11 // pred_fallthru
          _
        // Predicated region
        $region25: #{tpu_custom_call.1} parent=11 // pred_check
          %p306 = pneg %p153
        $region26: #{tpu_custom_call.1} parent=11 // pred_check_branch
          %308 = sbr.rel (%p306) target = $region28
        $region27: #{tpu_custom_call.1} parent=11 // pred_region
          _
        $region28: #{tpu_custom_call.1} parent=11 // pred_fallthru
          _
        // Predicated region
        $region29: #{tpu_custom_call.1} parent=11 // pred_check
          %p309 = pneg %p174
        $region30: #{tpu_custom_call.1} parent=11 // pred_check_branch
          %311 = sbr.rel (%p309) target = $region32
        $region31: #{tpu_custom_call.1} parent=11 // pred_region
          %313 = vsyncadd [#allocation9], 0
          %s314 = sshll.u32 %s5, 4
          %s315 = int_to_ptr.hbm [resolvable:$true] %s314
          %s316 = sshll.u32 [#allocation10], 4
          %s317 = int_to_ptr.vmem [resolvable:$true] %s316
          %322 = dma.hbm_to_vmem [thread:$0]  %s315, 8192, %s317, [#allocation9], 128, 128, 8
        $region32: #{tpu_custom_call.1} parent=11 // pred_fallthru
          _
        // Predicated region
        $region33: #{tpu_custom_call.1} parent=11 // pred_check
          %p323 = pneg %p195
        $region34: #{tpu_custom_call.1} parent=11 // pred_check_branch
          %325 = sbr.rel (%p323) target = $region36
        $region35: #{tpu_custom_call.1} parent=11 // pred_region
          _
        $region36: #{tpu_custom_call.1} parent=11 // pred_fallthru
          _
        // Predicated region
        $region37: #{tpu_custom_call.1} parent=11 // pred_check
          %p326 = pneg %p216
        $region38: #{tpu_custom_call.1} parent=11 // pred_check_branch
          %328 = sbr.rel (%p326) target = $region40
        $region39: #{tpu_custom_call.1} parent=11 // pred_region
          %330 = vsyncadd [#allocation12], 0
          %s331 = sshll.u32 %s7, 4
          %s332 = int_to_ptr.hbm [resolvable:$true] %s331
          %s333 = sshll.u32 [#allocation11], 4
          %s334 = int_to_ptr.vmem [resolvable:$true] %s333
          %339 = dma.hbm_to_vmem [thread:$0]  %s332, 2048, %s334, [#allocation12], 64, 64, 4
        $region40: #{tpu_custom_call.1} parent=11 // pred_fallthru
          _
        // Predicated region
        $region41: #{tpu_custom_call.1} parent=11 // pred_check
          %p340 = pneg %p237
        $region42: #{tpu_custom_call.1} parent=11 // pred_check_branch
          %342 = sbr.rel (%p340) target = $region44
        $region43: #{tpu_custom_call.1} parent=11 // pred_region
          _
        $region44: #{tpu_custom_call.1} parent=11 // pred_fallthru
          _
      $region12: #{tpu_custom_call.1} parent=5 // pred_fallthru
        _
      %p343 = scmp.lt.s32.totalorder %s21, 2
      // Predicated region
      $region45: #{tpu_custom_call.1} parent=5 // pred_check
        %p344 = pneg %p343
      $region46: #{tpu_custom_call.1} parent=5 // pred_check_branch
        %346 = sbr.rel (%p344) target = $region48
      $region47: #{tpu_custom_call.1} parent=5 // pred_region
        // Predicated region
        $region49: #{tpu_custom_call.1} parent=47 // pred_check
          %p347 = pneg %p105
        $region50: #{tpu_custom_call.1} parent=47 // pred_check_branch
          %349 = sbr.rel (%p347) target = $region52
        $region51: #{tpu_custom_call.1} parent=47 // pred_region
          %s350 = sand.u32 %s95, 1
          %s351 = scalar_lea.sflag [#allocation6], %s350
          %s352 = sand.u32 %s95, 1
          %s353 = smul.addr %s352, 32
          %s354 = scalar_lea.vmem [#allocation5], %s353
          %s355 = smul.u32 4, %s29
          %357 = vsyncadd %s351, 0
          %s358 = smul.addr %s355, 2
          %s359 = smul.addr %s358, 4
          %s360 = scalar_lea.hbm %s2, %s359
          %s361 = sshll.u32 %s360, 4
          %s362 = int_to_ptr.hbm [resolvable:$true] %s361
          %s363 = sshll.u32 %s354, 4
          %s364 = int_to_ptr.vmem [resolvable:$true] %s363
          %369 = dma.hbm_to_vmem [thread:$0]  %s362, 512, %s364, %s351, 128, 128, 8
        $region52: #{tpu_custom_call.1} parent=47 // pred_fallthru
          _
      $region48: #{tpu_custom_call.1} parent=5 // pred_fallthru
        _
      %p370 = scmp.le.s32.totalorder 1, %s21
      %p371 = scmp.lt.s32.totalorder %s21, 3
      %p372 = pnand %p370, %p371
      %p373 = pneg %p372
      // Predicated region
      $region53: #{tpu_custom_call.1} parent=5 // pred_check
        _
      $region54: #{tpu_custom_call.1} parent=5 // pred_check_branch
        %375 = sbr.rel (%p372) target = $region56
      $region55: #{tpu_custom_call.1} parent=5 // pred_region
        %s376 = ssub.s32 %s21, 1
        %s377 = sand.u32 %s98, 1
        %s378 = scalar_lea.sflag [#allocation6], %s377
        %s379 = sand.u32 %s98, 1
        %s380 = smul.addr %s379, 32
        %s381 = scalar_lea.vmem [#allocation5], %s380
        // Predicated region
        $region57: #{tpu_custom_call.1} parent=55 // pred_check
          %p382 = pneg %p111
        $region58: #{tpu_custom_call.1} parent=55 // pred_check_branch
          %384 = sbr.rel (%p382) target = $region60
        $region59: #{tpu_custom_call.1} parent=55 // pred_region
          %386 = dma.done %s378, 512
        $region60: #{tpu_custom_call.1} parent=55 // pred_fallthru
          _
        // Predicated region
        $region61: #{tpu_custom_call.1} parent=55 // pred_check
          %p387 = pneg %p132
        $region62: #{tpu_custom_call.1} parent=55 // pred_check_branch
          %389 = sbr.rel (%p387) target = $region64
        $region63: #{tpu_custom_call.1} parent=55 // pred_region
          %391 = dma.done [#allocation9], 8192
        $region64: #{tpu_custom_call.1} parent=55 // pred_fallthru
          _
        // Predicated region
        $region65: #{tpu_custom_call.1} parent=55 // pred_check
          %p392 = pneg %p174
        $region66: #{tpu_custom_call.1} parent=55 // pred_check_branch
          %394 = sbr.rel (%p392) target = $region68
        $region67: #{tpu_custom_call.1} parent=55 // pred_region
          %396 = dma.done [#allocation9], 8192
        $region68: #{tpu_custom_call.1} parent=55 // pred_fallthru
          _
        // Predicated region
        $region69: #{tpu_custom_call.1} parent=55 // pred_check
          %p397 = pneg %p216
        $region70: #{tpu_custom_call.1} parent=55 // pred_check_branch
          %399 = sbr.rel (%p397) target = $region72
        $region71: #{tpu_custom_call.1} parent=55 // pred_region
          %401 = dma.done [#allocation12], 2048
        $region72: #{tpu_custom_call.1} parent=55 // pred_fallthru
          _
        %p402 = scmp.lt.s32.totalorder %s30, 0
        %s403 = scalar_select %p402, %s30, 0
        %s404 = smul.addr %s403, 8
        %s405 = scalar_lea.vmem %s0, %s404
        %p406 = pneg %p59
        %p407 = pneg %p56
        %p408 = scmp.lt.s32.totalorder %s30, 0
        %s409 = scalar_select %p408, %s30, 0
        %s410 = smul.addr %s409, 8
        %s411 = scalar_lea.vmem %s1, %s410
        %p412 = pneg %p85
        %p413 = pneg %p82
        %s414 = sand.u32 %s98, 1
        %s415 = scalar_lea.sflag [#allocation6], %s414
        %s416 = sand.u32 %s98, 1
        %s417 = smul.addr %s416, 32
        %s418 = scalar_lea.vmem [#allocation5], %s417
        %p419 = pneg %p111
        %p420 = pneg %p108
        %p421 = pneg %p132
        %p422 = pneg %p129
        %p423 = pneg %p153
        %p424 = pneg %p150
        %p425 = pneg %p174
        %p426 = pneg %p171
        %p427 = pneg %p195
        %p428 = pneg %p192
        %p429 = pneg %p216
        %p430 = pneg %p213
        %p431 = pneg %p237
        %p432 = pneg %p234
        %p433 = pneg %p263
        %p434 = pneg %p260
        %p435 = scmp.lt.s32.totalorder %s30, 0
        %s436 = scalar_select %p435, %s30, 0
        %s437 = smul.addr %s436, 8
        %s438 = scalar_lea.vmem %s0, %s437
        %p439 = scmp.lt.s32.totalorder %s30, 0
        %s440 = scalar_select %p439, %s30, 0
        %s441 = smul.addr %s440, 8
        %s442 = scalar_lea.vmem %s1, %s441
        %s443 = smul.u32 4, %s31
        %p445 = scmp.eq.s32.totalorder %s31, 0
        // Predicated region
        $region73: #{tpu_custom_call.1} parent=55 // pred_check
          %p446 = pneg %p445
        $region74: #{tpu_custom_call.1} parent=55 // pred_check_branch
          %448 = sbr.rel (%p446) target = $region76
        $region75: #{tpu_custom_call.1} parent=55 // pred_region
          %449 = vst [vmem:[#allocation2] sm:$0xff] 0.0
          %450 = vst [vmem:[#allocation2 + $0x8] sm:$0xff] 0.0
          %v451 = vld [vmem:[%s442] sm:$0xff]
          %vm452 = vcmp.gt.s32.totalorder %v451, 1
          %v453 = vsel %vm452, %v451, 1
          %v454 = vcvt.s32.f32 %v453
          %v455 = vrcp.pop %v454
          %v456 = vmul.f32 %v454, %v455
          %v457 = vsub.f32 1.0, %v456
          %v458 = vmul.f32 %v455, %v457
          %v459 = vadd.f32 %v455, %v458
          %vm460 = vweird.f32 %v454
          %vm461 = vweird.f32 %v455
          %vm462 = vmor %vm460, %vm461
          %v463 = vsel %vm462, %v455, %v459
          %v464 = vand.u32 2147483647, %v454
          %vm465 = vcmp.eq.f32.partialorder %v464, 8.507059e+37
          %v466 = vand.u32 %v454, 2147483648
          %v467 = vor.u32 1.1754944e-38, %v466
          %v468 = vsel %vm465, %v467, %v463
          %v469 = vmul.f32 1.0, %v468
          %vm470 = vcmask 7168
          %471 = vst.msk [vmem:[#allocation4] sm:$0xff] %vm470, %v469
          %v472 = vlaneseq
          %v473 = vand.u32 %v472, 127
          %474 = vset.pattern.permute.xlu0 0
          %475 = vperm.xlu0 %474, %v451
          %v476 = vpop.permute.xlu0 %475
          %vm477 = vcmp.lt.s32.totalorder %v473, %v476
          %v478 = vld [vmem:[%s438] sm:$0xff]
          %v479 = vsel %vm477, %v478, 4294967295
          %vm480 = vcmask 130048
          %481 = vst.msk [vmem:[#allocation3] sm:$0xff] %vm480, %v479
        $region76: #{tpu_custom_call.1} parent=55 // pred_fallthru
          _
        %v482 = vld [vmem:[#allocation3] sm:$0xff]
        %v483 = vlaneseq
        %v484 = vand.u32 %v483, 127
        %s485 = smul.u32 %s31, 32
        %v486 = vstv %s485
        %v487 = vadd.s32 %v484, %v486
        %488 = vset.pattern.permute.xlu0 0
        %489 = vperm.xlu0 %488, %v482
        %v490 = vpop.permute.xlu0 %489
        %vm491 = vcmp.eq.s32.totalorder %v490, %v487
        %v492 = vsel %vm491, 1, 0
        %493 = vset.pattern.permute.xlu0 1
        %494 = vperm.xlu0 %493, %v482
        %v495 = vpop.permute.xlu0 %494
        %vm496 = vcmp.eq.s32.totalorder %v495, %v487
        %v497 = vsel %vm496, 1, 0
        %498 = vset.pattern.permute.xlu0 2
        %499 = vperm.xlu0 %498, %v482
        %v500 = vpop.permute.xlu0 %499
        %vm501 = vcmp.eq.s32.totalorder %v500, %v487
        %v502 = vsel %vm501, 1, 0
        %v503 = vadd.s32 %v492, %v502
        %504 = vset.pattern.permute.xlu0 3
        %505 = vperm.xlu0 %504, %v482
        %v506 = vpop.permute.xlu0 %505
        %vm507 = vcmp.eq.s32.totalorder %v506, %v487
        %v508 = vsel %vm507, 1, 0
        %v509 = vadd.s32 %v497, %v508
        %510 = vset.pattern.permute.xlu0 4
        %511 = vperm.xlu0 %510, %v482
        %v512 = vpop.permute.xlu0 %511
        %vm513 = vcmp.eq.s32.totalorder %v512, %v487
        %v514 = vsel %vm513, 1, 0
        %v515 = vadd.s32 %v503, %v514
        %516 = vset.pattern.permute.xlu0 5
        %517 = vperm.xlu0 %516, %v482
        %v518 = vpop.permute.xlu0 %517
        %vm519 = vcmp.eq.s32.totalorder %v518, %v487
        %v520 = vsel %vm519, 1, 0
        %v521 = vadd.s32 %v509, %v520
        %522 = vset.pattern.permute.xlu0 6
        %523 = vperm.xlu0 %522, %v482
        %v524 = vpop.permute.xlu0 %523
        %vm525 = vcmp.eq.s32.totalorder %v524, %v487
        %v526 = vsel %vm525, 1, 0
        %v527 = vadd.s32 %v515, %v526
        %528 = vset.pattern.permute.xlu0 7
        %529 = vperm.xlu0 %528, %v482
        %v530 = vpop.permute.xlu0 %529
        %vm531 = vcmp.eq.s32.totalorder %v530, %v487
        %v532 = vsel %vm531, 1, 0
        %v533 = vadd.s32 %v521, %v532
        %534 = vset.pattern.permute.xlu0 8
        %535 = vperm.xlu0 %534, %v482
        %v536 = vpop.permute.xlu0 %535
        %vm537 = vcmp.eq.s32.totalorder %v536, %v487
        %v538 = vsel %vm537, 1, 0
        %v539 = vadd.s32 %v527, %v538
        %540 = vset.pattern.permute.xlu0 9
        %541 = vperm.xlu0 %540, %v482
        %v542 = vpop.permute.xlu0 %541
        %vm543 = vcmp.eq.s32.totalorder %v542, %v487
        %v544 = vsel %vm543, 1, 0
        %v545 = vadd.s32 %v533, %v544
        %546 = vset.pattern.permute.xlu0 10
        %547 = vperm.xlu0 %546, %v482
        %v548 = vpop.permute.xlu0 %547
        %vm549 = vcmp.eq.s32.totalorder %v548, %v487
        %v550 = vsel %vm549, 1, 0
        %v551 = vadd.s32 %v539, %v550
        %552 = vset.pattern.permute.xlu0 11
        %553 = vperm.xlu0 %552, %v482
        %v554 = vpop.permute.xlu0 %553
        %vm555 = vcmp.eq.s32.totalorder %v554, %v487
        %v556 = vsel %vm555, 1, 0
        %v557 = vadd.s32 %v545, %v556
        %558 = vset.pattern.permute.xlu0 12
        %559 = vperm.xlu0 %558, %v482
        %v560 = vpop.permute.xlu0 %559
        %vm561 = vcmp.eq.s32.totalorder %v560, %v487
        %v562 = vsel %vm561, 1, 0
        %v563 = vadd.s32 %v551, %v562
        %564 = vset.pattern.permute.xlu0 13
        %565 = vperm.xlu0 %564, %v482
        %v566 = vpop.permute.xlu0 %565
        %vm567 = vcmp.eq.s32.totalorder %v566, %v487
        %v568 = vsel %vm567, 1, 0
        %v569 = vadd.s32 %v557, %v568
        %570 = vset.pattern.permute.xlu0 14
        %571 = vperm.xlu0 %570, %v482
        %v572 = vpop.permute.xlu0 %571
        %vm573 = vcmp.eq.s32.totalorder %v572, %v487
        %v574 = vsel %vm573, 1, 0
        %v575 = vadd.s32 %v563, %v574
        %576 = vset.pattern.permute.xlu0 15
        %577 = vperm.xlu0 %576, %v482
        %v578 = vpop.permute.xlu0 %577
        %vm579 = vcmp.eq.s32.totalorder %v578, %v487
        %v580 = vsel %vm579, 1, 0
        %v581 = vadd.s32 %v569, %v580
        %v582 = vadd.s32 %v575, %v581
        %v583 = vld [vmem:[#allocation2] sm:$0xff]
        %v584 = vld [vmem:[#allocation2 + $0x8] sm:$0xff]
        %v585 = vcvt.s32.f32 %v582
        %v586 = vpack.c.bf16 %v585, %v585
        %v587 = vld [vmem:[%s381] sm:$0xff]
        %v588 = vld [vmem:[%s381 + $0x8] sm:$0xff]
        %v589 = vld [vmem:[%s381 + $0x10] sm:$0xff]
        %v590 = vld [vmem:[%s381 + $0x18] sm:$0xff]
        %v595 = vunpack.c.l.b16 %v587
        %v596 = vunpack.c.h.b16 %v587
        %v597 = vunpack.c.l.b16 %v588
        %v598 = vunpack.c.h.b16 %v588
        %v599 = vunpack.c.l.b16 %v589
        %v600 = vunpack.c.h.b16 %v589
        %v601 = vunpack.c.l.b16 %v590
        %v602 = vunpack.c.h.b16 %v590
        %v603 = vpack.c.b16 %v597, %v595
        %v604 = vpack.c.b16 %v598, %v596
        %v605 = vpack.c.b16 %v601, %v599
        %v606 = vpack.c.b16 %v602, %v600
        %vm611 = vcmask 261120
        %v613 = vsel %vm611, %v586, 0
        %615 = vmatpush.bf16.msra.mxu0 0
        %616 = vmatpush.bf16.msra.mxu0 0
        %617 = vmatpush.bf16.msra.mxu0 0
        %618 = vmatpush.bf16.msra.mxu0 0
        %619 = vmatpush.bf16.msra.mxu0 0
        %620 = vmatpush.bf16.msra.mxu0 0
        %621 = vmatpush.bf16.msra.mxu0 %v605
        %622 = vmatpush.bf16.msra.mxu0 %v603
        %623 = vmatmul.bf16.gmra.mxu0 %v613
        %v624 = vpop.f32.mrf.mxu0
        %v625 = vadd.f32 0.0, %v624
        %v626 = vpop.f32.mrf.mxu0
        %627 = vdwg.mxu0
        %628 = vmatpush.bf16.msra.mxu0 0
        %629 = vmatpush.bf16.msra.mxu0 0
        %630 = vmatpush.bf16.msra.mxu0 0
        %631 = vmatpush.bf16.msra.mxu0 0
        %632 = vmatpush.bf16.msra.mxu0 0
        %633 = vmatpush.bf16.msra.mxu0 0
        %634 = vmatpush.bf16.msra.mxu0 %v606
        %635 = vmatpush.bf16.msra.mxu0 %v604
        %636 = vmatmul.bf16.gmra.mxu0 %v613
        %v637 = vpop.f32.mrf.mxu0
        %v638 = vadd.f32 0.0, %v637
        %v639 = vpop.f32.mrf.mxu0
        %640 = vdwg.mxu0
        %v641 = vadd.f32 %v583, %v625
        %v642 = vadd.f32 %v584, %v638
        %643 = vst [vmem:[#allocation2] sm:$0xff] %v641
        %644 = vst [vmem:[#allocation2 + $0x8] sm:$0xff] %v642
        %p645 = scmp.eq.s32.totalorder %s31, 1
        // Predicated region
        $region77: #{tpu_custom_call.1} parent=55 // pred_check
          %p646 = pneg %p645
        $region78: #{tpu_custom_call.1} parent=55 // pred_check_branch
          %648 = sbr.rel (%p646) target = $region80
        $region79: #{tpu_custom_call.1} parent=55 // pred_region
          %v649 = vld [vmem:[#allocation2] sm:$0xff]
          %v650 = vld [vmem:[#allocation2 + $0x8] sm:$0xff]
          %v651 = vld [vmem:[#allocation4] sm:$0xff]
          %653 = vset.pattern.permute.xlu0 0
          %654 = vperm.xlu0 %653, %v651
          %v655 = vpop.permute.xlu0 %654
          %v657 = vmul.f32 %v649, %v655
          %v658 = vmul.f32 %v650, %v655
          %v659 = vpack.c.bf16 %v657, %v657
          %v660 = vpack.c.bf16 %v658, %v658
          %v661 = vld [vmem:[#allocation8] sm:$0xff]
          %v662 = vld [vmem:[#allocation8 + $0x8] sm:$0xff]
          %v663 = vld [vmem:[#allocation8 + $0x10] sm:$0xff]
          %v664 = vld [vmem:[#allocation8 + $0x18] sm:$0xff]
          %v665 = vld [vmem:[#allocation8 + $0x20] sm:$0xff]
          %v666 = vld [vmem:[#allocation8 + $0x28] sm:$0xff]
          %v667 = vld [vmem:[#allocation8 + $0x30] sm:$0xff]
          %v668 = vld [vmem:[#allocation8 + $0x38] sm:$0xff]
          %v669 = vld [vmem:[#allocation8 + $0x40] sm:$0xff]
          %v670 = vld [vmem:[#allocation8 + $0x48] sm:$0xff]
          %v671 = vld [vmem:[#allocation8 + $0x50] sm:$0xff]
          %v672 = vld [vmem:[#allocation8 + $0x58] sm:$0xff]
          %v673 = vld [vmem:[#allocation8 + $0x60] sm:$0xff]
          %v674 = vld [vmem:[#allocation8 + $0x68] sm:$0xff]
          %v675 = vld [vmem:[#allocation8 + $0x70] sm:$0xff]
          %v676 = vld [vmem:[#allocation8 + $0x78] sm:$0xff]
          %v677 = vld [vmem:[#allocation8 + $0x80] sm:$0xff]
          %v678 = vld [vmem:[#allocation8 + $0x88] sm:$0xff]
          %v679 = vld [vmem:[#allocation8 + $0x90] sm:$0xff]
          %v680 = vld [vmem:[#allocation8 + $0x98] sm:$0xff]
          %v681 = vld [vmem:[#allocation8 + $0xa0] sm:$0xff]
          %v682 = vld [vmem:[#allocation8 + $0xa8] sm:$0xff]
          %v683 = vld [vmem:[#allocation8 + $0xb0] sm:$0xff]
          %v684 = vld [vmem:[#allocation8 + $0xb8] sm:$0xff]
          %v685 = vld [vmem:[#allocation8 + $0xc0] sm:$0xff]
          %v686 = vld [vmem:[#allocation8 + $0xc8] sm:$0xff]
          %v687 = vld [vmem:[#allocation8 + $0xd0] sm:$0xff]
          %v688 = vld [vmem:[#allocation8 + $0xd8] sm:$0xff]
          %v689 = vld [vmem:[#allocation8 + $0xe0] sm:$0xff]
          %v690 = vld [vmem:[#allocation8 + $0xe8] sm:$0xff]
          %v691 = vld [vmem:[#allocation8 + $0xf0] sm:$0xff]
          %v692 = vld [vmem:[#allocation8 + $0xf8] sm:$0xff]
          %v693 = vld [vmem:[#allocation8 + $0x100] sm:$0xff]
          %v694 = vld [vmem:[#allocation8 + $0x108] sm:$0xff]
          %v695 = vld [vmem:[#allocation8 + $0x110] sm:$0xff]
          %v696 = vld [vmem:[#allocation8 + $0x118] sm:$0xff]
          %v697 = vld [vmem:[#allocation8 + $0x120] sm:$0xff]
          %v698 = vld [vmem:[#allocation8 + $0x128] sm:$0xff]
          %v699 = vld [vmem:[#allocation8 + $0x130] sm:$0xff]
          %v700 = vld [vmem:[#allocation8 + $0x138] sm:$0xff]
          %v701 = vld [vmem:[#allocation8 + $0x140] sm:$0xff]
          %v702 = vld [vmem:[#allocation8 + $0x148] sm:$0xff]
          %v703 = vld [vmem:[#allocation8 + $0x150] sm:$0xff]
          %v704 = vld [vmem:[#allocation8 + $0x158] sm:$0xff]
          %v705 = vld [vmem:[#allocation8 + $0x160] sm:$0xff]
          %v706 = vld [vmem:[#allocation8 + $0x168] sm:$0xff]
          %v707 = vld [vmem:[#allocation8 + $0x170] sm:$0xff]
          %v708 = vld [vmem:[#allocation8 + $0x178] sm:$0xff]
          %v709 = vld [vmem:[#allocation8 + $0x180] sm:$0xff]
          %v710 = vld [vmem:[#allocation8 + $0x188] sm:$0xff]
          %v711 = vld [vmem:[#allocation8 + $0x190] sm:$0xff]
          %v712 = vld [vmem:[#allocation8 + $0x198] sm:$0xff]
          %v713 = vld [vmem:[#allocation8 + $0x1a0] sm:$0xff]
          %v714 = vld [vmem:[#allocation8 + $0x1a8] sm:$0xff]
          %v715 = vld [vmem:[#allocation8 + $0x1b0] sm:$0xff]
          %v716 = vld [vmem:[#allocation8 + $0x1b8] sm:$0xff]
          %v717 = vld [vmem:[#allocation8 + $0x1c0] sm:$0xff]
          %v718 = vld [vmem:[#allocation8 + $0x1c8] sm:$0xff]
          %v719 = vld [vmem:[#allocation8 + $0x1d0] sm:$0xff]
          %v720 = vld [vmem:[#allocation8 + $0x1d8] sm:$0xff]
          %v721 = vld [vmem:[#allocation8 + $0x1e0] sm:$0xff]
          %v722 = vld [vmem:[#allocation8 + $0x1e8] sm:$0xff]
          %v723 = vld [vmem:[#allocation8 + $0x1f0] sm:$0xff]
          %v724 = vld [vmem:[#allocation8 + $0x1f8] sm:$0xff]
          %v725 = vld [vmem:[%s4] sm:$0xf]
          %v727 = vperm.slane %v725, 0
          %v728 = vperm.slane %v725, 1
          %v729 = vperm.slane %v725, 2
          %v730 = vperm.slane %v725, 3
          %v799 = vunpack.c.l.b16 %v661
          %v800 = vunpack.c.h.b16 %v661
          %v801 = vunpack.c.l.b16 %v662
          %v802 = vunpack.c.h.b16 %v662
          %v803 = vunpack.c.l.b16 %v663
          %v804 = vunpack.c.h.b16 %v663
          %v805 = vunpack.c.l.b16 %v664
          %v806 = vunpack.c.h.b16 %v664
          %v807 = vunpack.c.l.b16 %v665
          %v808 = vunpack.c.h.b16 %v665
          %v809 = vunpack.c.l.b16 %v666
          %v810 = vunpack.c.h.b16 %v666
          %v811 = vunpack.c.l.b16 %v667
          %v812 = vunpack.c.h.b16 %v667
          %v813 = vunpack.c.l.b16 %v668
          %v814 = vunpack.c.h.b16 %v668
          %v815 = vunpack.c.l.b16 %v669
          %v816 = vunpack.c.h.b16 %v669
          %v817 = vunpack.c.l.b16 %v670
          %v818 = vunpack.c.h.b16 %v670
          %v819 = vunpack.c.l.b16 %v671
          %v820 = vunpack.c.h.b16 %v671
          %v821 = vunpack.c.l.b16 %v672
          %v822 = vunpack.c.h.b16 %v672
          %v823 = vunpack.c.l.b16 %v673
          %v824 = vunpack.c.h.b16 %v673
          %v825 = vunpack.c.l.b16 %v674
          %v826 = vunpack.c.h.b16 %v674
          %v827 = vunpack.c.l.b16 %v675
          %v828 = vunpack.c.h.b16 %v675
          %v829 = vunpack.c.l.b16 %v676
          %v830 = vunpack.c.h.b16 %v676
          %v831 = vunpack.c.l.b16 %v677
          %v832 = vunpack.c.h.b16 %v677
          %v833 = vunpack.c.l.b16 %v678
          %v834 = vunpack.c.h.b16 %v678
          %v835 = vunpack.c.l.b16 %v679
          %v836 = vunpack.c.h.b16 %v679
          %v837 = vunpack.c.l.b16 %v680
          %v838 = vunpack.c.h.b16 %v680
          %v839 = vunpack.c.l.b16 %v681
          %v840 = vunpack.c.h.b16 %v681
          %v841 = vunpack.c.l.b16 %v682
          %v842 = vunpack.c.h.b16 %v682
          %v843 = vunpack.c.l.b16 %v683
          %v844 = vunpack.c.h.b16 %v683
          %v845 = vunpack.c.l.b16 %v684
          %v846 = vunpack.c.h.b16 %v684
          %v847 = vunpack.c.l.b16 %v685
          %v848 = vunpack.c.h.b16 %v685
          %v849 = vunpack.c.l.b16 %v686
          %v850 = vunpack.c.h.b16 %v686
          %v851 = vunpack.c.l.b16 %v687
          %v852 = vunpack.c.h.b16 %v687
          %v853 = vunpack.c.l.b16 %v688
          %v854 = vunpack.c.h.b16 %v688
          %v855 = vunpack.c.l.b16 %v689
          %v856 = vunpack.c.h.b16 %v689
          %v857 = vunpack.c.l.b16 %v690
          %v858 = vunpack.c.h.b16 %v690
          %v859 = vunpack.c.l.b16 %v691
          %v860 = vunpack.c.h.b16 %v691
          %v861 = vunpack.c.l.b16 %v692
          %v862 = vunpack.c.h.b16 %v692
          %v863 = vunpack.c.l.b16 %v693
          %v864 = vunpack.c.h.b16 %v693
          %v865 = vunpack.c.l.b16 %v694
          %v866 = vunpack.c.h.b16 %v694
          %v867 = vunpack.c.l.b16 %v695
          %v868 = vunpack.c.h.b16 %v695
          %v869 = vunpack.c.l.b16 %v696
          %v870 = vunpack.c.h.b16 %v696
          %v871 = vunpack.c.l.b16 %v697
          %v872 = vunpack.c.h.b16 %v697
          %v873 = vunpack.c.l.b16 %v698
          %v874 = vunpack.c.h.b16 %v698
          %v875 = vunpack.c.l.b16 %v699
          %v876 = vunpack.c.h.b16 %v699
          %v877 = vunpack.c.l.b16 %v700
          %v878 = vunpack.c.h.b16 %v700
          %v879 = vunpack.c.l.b16 %v701
          %v880 = vunpack.c.h.b16 %v701
          %v881 = vunpack.c.l.b16 %v702
          %v882 = vunpack.c.h.b16 %v702
          %v883 = vunpack.c.l.b16 %v703
          %v884 = vunpack.c.h.b16 %v703
          %v885 = vunpack.c.l.b16 %v704
          %v886 = vunpack.c.h.b16 %v704
          %v887 = vunpack.c.l.b16 %v705
          %v888 = vunpack.c.h.b16 %v705
          %v889 = vunpack.c.l.b16 %v706
          %v890 = vunpack.c.h.b16 %v706
          %v891 = vunpack.c.l.b16 %v707
          %v892 = vunpack.c.h.b16 %v707
          %v893 = vunpack.c.l.b16 %v708
          %v894 = vunpack.c.h.b16 %v708
          %v895 = vunpack.c.l.b16 %v709
          %v896 = vunpack.c.h.b16 %v709
          %v897 = vunpack.c.l.b16 %v710
          %v898 = vunpack.c.h.b16 %v710
          %v899 = vunpack.c.l.b16 %v711
          %v900 = vunpack.c.h.b16 %v711
          %v901 = vunpack.c.l.b16 %v712
          %v902 = vunpack.c.h.b16 %v712
          %v903 = vunpack.c.l.b16 %v713
          %v904 = vunpack.c.h.b16 %v713
          %v905 = vunpack.c.l.b16 %v714
          %v906 = vunpack.c.h.b16 %v714
          %v907 = vunpack.c.l.b16 %v715
          %v908 = vunpack.c.h.b16 %v715
          %v909 = vunpack.c.l.b16 %v716
          %v910 = vunpack.c.h.b16 %v716
          %v911 = vunpack.c.l.b16 %v717
          %v912 = vunpack.c.h.b16 %v717
          %v913 = vunpack.c.l.b16 %v718
          %v914 = vunpack.c.h.b16 %v718
          %v915 = vunpack.c.l.b16 %v719
          %v916 = vunpack.c.h.b16 %v719
          %v917 = vunpack.c.l.b16 %v720
          %v918 = vunpack.c.h.b16 %v720
          %v919 = vunpack.c.l.b16 %v721
          %v920 = vunpack.c.h.b16 %v721
          %v921 = vunpack.c.l.b16 %v722
          %v922 = vunpack.c.h.b16 %v722
          %v923 = vunpack.c.l.b16 %v723
          %v924 = vunpack.c.h.b16 %v723
          %v925 = vunpack.c.l.b16 %v724
          %v926 = vunpack.c.h.b16 %v724
          %v927 = vpack.c.b16 %v803, %v799
          %v928 = vpack.c.b16 %v804, %v800
          %v929 = vpack.c.b16 %v805, %v801
          %v930 = vpack.c.b16 %v806, %v802
          %v931 = vpack.c.b16 %v811, %v807
          %v932 = vpack.c.b16 %v812, %v808
          %v933 = vpack.c.b16 %v813, %v809
          %v934 = vpack.c.b16 %v814, %v810
          %v935 = vpack.c.b16 %v819, %v815
          %v936 = vpack.c.b16 %v820, %v816
          %v937 = vpack.c.b16 %v821, %v817
          %v938 = vpack.c.b16 %v822, %v818
          %v939 = vpack.c.b16 %v827, %v823
          %v940 = vpack.c.b16 %v828, %v824
          %v941 = vpack.c.b16 %v829, %v825
          %v942 = vpack.c.b16 %v830, %v826
          %v943 = vpack.c.b16 %v835, %v831
          %v944 = vpack.c.b16 %v836, %v832
          %v945 = vpack.c.b16 %v837, %v833
          %v946 = vpack.c.b16 %v838, %v834
          %v947 = vpack.c.b16 %v843, %v839
          %v948 = vpack.c.b16 %v844, %v840
          %v949 = vpack.c.b16 %v845, %v841
          %v950 = vpack.c.b16 %v846, %v842
          %v951 = vpack.c.b16 %v851, %v847
          %v952 = vpack.c.b16 %v852, %v848
          %v953 = vpack.c.b16 %v853, %v849
          %v954 = vpack.c.b16 %v854, %v850
          %v955 = vpack.c.b16 %v859, %v855
          %v956 = vpack.c.b16 %v860, %v856
          %v957 = vpack.c.b16 %v861, %v857
          %v958 = vpack.c.b16 %v862, %v858
          %v959 = vpack.c.b16 %v867, %v863
          %v960 = vpack.c.b16 %v868, %v864
          %v961 = vpack.c.b16 %v869, %v865
          %v962 = vpack.c.b16 %v870, %v866
          %v963 = vpack.c.b16 %v875, %v871
          %v964 = vpack.c.b16 %v876, %v872
          %v965 = vpack.c.b16 %v877, %v873
          %v966 = vpack.c.b16 %v878, %v874
          %v967 = vpack.c.b16 %v883, %v879
          %v968 = vpack.c.b16 %v884, %v880
          %v969 = vpack.c.b16 %v885, %v881
          %v970 = vpack.c.b16 %v886, %v882
          %v971 = vpack.c.b16 %v891, %v887
          %v972 = vpack.c.b16 %v892, %v888
          %v973 = vpack.c.b16 %v893, %v889
          %v974 = vpack.c.b16 %v894, %v890
          %v975 = vpack.c.b16 %v899, %v895
          %v976 = vpack.c.b16 %v900, %v896
          %v977 = vpack.c.b16 %v901, %v897
          %v978 = vpack.c.b16 %v902, %v898
          %v979 = vpack.c.b16 %v907, %v903
          %v980 = vpack.c.b16 %v908, %v904
          %v981 = vpack.c.b16 %v909, %v905
          %v982 = vpack.c.b16 %v910, %v906
          %v983 = vpack.c.b16 %v915, %v911
          %v984 = vpack.c.b16 %v916, %v912
          %v985 = vpack.c.b16 %v917, %v913
          %v986 = vpack.c.b16 %v918, %v914
          %v987 = vpack.c.b16 %v923, %v919
          %v988 = vpack.c.b16 %v924, %v920
          %v989 = vpack.c.b16 %v925, %v921
          %v990 = vpack.c.b16 %v926, %v922
          %1055 = vmatpush.bf16.msra.mxu0 %v955
          %1056 = vmatpush.bf16.msra.mxu0 %v951
          %1057 = vmatpush.bf16.msra.mxu0 %v947
          %1058 = vmatpush.bf16.msra.mxu0 %v943
          %1059 = vmatpush.bf16.msra.mxu0 %v939
          %1060 = vmatpush.bf16.msra.mxu0 %v935
          %1061 = vmatpush.bf16.msra.mxu0 %v931
          %1062 = vmatpush.bf16.msra.mxu0 %v927
          %1063 = vmatmul.bf16.gmra.mxu0 %v659
          %v1064 = vpop.f32.mrf.mxu0
          %v1065 = vadd.f32 %v727, %v1064
          %v1066 = vpop.f32.mrf.mxu0
          %1067 = vdwg.mxu0
          %1068 = vmatpush.bf16.msra.mxu0 %v987
          %1069 = vmatpush.bf16.msra.mxu0 %v983
          %1070 = vmatpush.bf16.msra.mxu0 %v979
          %1071 = vmatpush.bf16.msra.mxu0 %v975
          %1072 = vmatpush.bf16.msra.mxu0 %v971
          %1073 = vmatpush.bf16.msra.mxu0 %v967
          %1074 = vmatpush.bf16.msra.mxu0 %v963
          %1075 = vmatpush.bf16.msra.mxu0 %v959
          %1076 = vmatmul.bf16.gmra.mxu0 %v660
          %v1077 = vpop.f32.mrf.mxu0
          %v1078 = vadd.f32 %v1065, %v1077
          %v1079 = vpop.f32.mrf.mxu0
          %1080 = vdwg.mxu0
          %1081 = vmatpush.bf16.msra.mxu0 %v956
          %1082 = vmatpush.bf16.msra.mxu0 %v952
          %1083 = vmatpush.bf16.msra.mxu0 %v948
          %1084 = vmatpush.bf16.msra.mxu0 %v944
          %1085 = vmatpush.bf16.msra.mxu0 %v940
          %1086 = vmatpush.bf16.msra.mxu0 %v936
          %1087 = vmatpush.bf16.msra.mxu0 %v932
          %1088 = vmatpush.bf16.msra.mxu0 %v928
          %1089 = vmatmul.bf16.gmra.mxu0 %v659
          %v1090 = vpop.f32.mrf.mxu0
          %v1091 = vadd.f32 %v728, %v1090
          %v1092 = vpop.f32.mrf.mxu0
          %1093 = vdwg.mxu0
          %1094 = vmatpush.bf16.msra.mxu0 %v988
          %1095 = vmatpush.bf16.msra.mxu0 %v984
          %1096 = vmatpush.bf16.msra.mxu0 %v980
          %1097 = vmatpush.bf16.msra.mxu0 %v976
          %1098 = vmatpush.bf16.msra.mxu0 %v972
          %1099 = vmatpush.bf16.msra.mxu0 %v968
          %1100 = vmatpush.bf16.msra.mxu0 %v964
          %1101 = vmatpush.bf16.msra.mxu0 %v960
          %1102 = vmatmul.bf16.gmra.mxu0 %v660
          %v1103 = vpop.f32.mrf.mxu0
          %v1104 = vadd.f32 %v1091, %v1103
          %v1105 = vpop.f32.mrf.mxu0
          %1106 = vdwg.mxu0
          %1107 = vmatpush.bf16.msra.mxu0 %v957
          %1108 = vmatpush.bf16.msra.mxu0 %v953
          %1109 = vmatpush.bf16.msra.mxu0 %v949
          %1110 = vmatpush.bf16.msra.mxu0 %v945
          %1111 = vmatpush.bf16.msra.mxu0 %v941
          %1112 = vmatpush.bf16.msra.mxu0 %v937
          %1113 = vmatpush.bf16.msra.mxu0 %v933
          %1114 = vmatpush.bf16.msra.mxu0 %v929
          %1115 = vmatmul.bf16.gmra.mxu0 %v659
          %v1116 = vpop.f32.mrf.mxu0
          %v1117 = vadd.f32 %v729, %v1116
          %v1118 = vpop.f32.mrf.mxu0
          %1119 = vdwg.mxu0
          %1120 = vmatpush.bf16.msra.mxu0 %v989
          %1121 = vmatpush.bf16.msra.mxu0 %v985
          %1122 = vmatpush.bf16.msra.mxu0 %v981
          %1123 = vmatpush.bf16.msra.mxu0 %v977
          %1124 = vmatpush.bf16.msra.mxu0 %v973
          %1125 = vmatpush.bf16.msra.mxu0 %v969
          %1126 = vmatpush.bf16.msra.mxu0 %v965
          %1127 = vmatpush.bf16.msra.mxu0 %v961
          %1128 = vmatmul.bf16.gmra.mxu0 %v660
          %v1129 = vpop.f32.mrf.mxu0
          %v1130 = vadd.f32 %v1117, %v1129
          %v1131 = vpop.f32.mrf.mxu0
          %1132 = vdwg.mxu0
          %1133 = vmatpush.bf16.msra.mxu0 %v958
          %1134 = vmatpush.bf16.msra.mxu0 %v954
          %1135 = vmatpush.bf16.msra.mxu0 %v950
          %1136 = vmatpush.bf16.msra.mxu0 %v946
          %1137 = vmatpush.bf16.msra.mxu0 %v942
          %1138 = vmatpush.bf16.msra.mxu0 %v938
          %1139 = vmatpush.bf16.msra.mxu0 %v934
          %1140 = vmatpush.bf16.msra.mxu0 %v930
          %1141 = vmatmul.bf16.gmra.mxu0 %v659
          %v1142 = vpop.f32.mrf.mxu0
          %v1143 = vadd.f32 %v730, %v1142
          %v1144 = vpop.f32.mrf.mxu0
          %1145 = vdwg.mxu0
          %1146 = vmatpush.bf16.msra.mxu0 %v990
          %1147 = vmatpush.bf16.msra.mxu0 %v986
          %1148 = vmatpush.bf16.msra.mxu0 %v982
          %1149 = vmatpush.bf16.msra.mxu0 %v978
          %1150 = vmatpush.bf16.msra.mxu0 %v974
          %1151 = vmatpush.bf16.msra.mxu0 %v970
          %1152 = vmatpush.bf16.msra.mxu0 %v966
          %1153 = vmatpush.bf16.msra.mxu0 %v962
          %1154 = vmatmul.bf16.gmra.mxu0 %v660
          %v1155 = vpop.f32.mrf.mxu0
          %v1156 = vadd.f32 %v1143, %v1155
          %v1157 = vpop.f32.mrf.mxu0
          %1158 = vdwg.mxu0
          %v1159 = vmax.f32 %v1078, 0.0
          %v1160 = vmax.f32 %v1104, 0.0
          %v1161 = vmax.f32 %v1130, 0.0
          %v1162 = vmax.f32 %v1156, 0.0
          %v1163 = vpack.c.bf16 %v1159, %v1159
          %v1164 = vpack.c.bf16 %v1160, %v1160
          %v1165 = vpack.c.bf16 %v1161, %v1161
          %v1166 = vpack.c.bf16 %v1162, %v1162
          %v1167 = vld [vmem:[#allocation10] sm:$0xff]
          %v1168 = vld [vmem:[#allocation10 + $0x8] sm:$0xff]
          %v1169 = vld [vmem:[#allocation10 + $0x10] sm:$0xff]
          %v1170 = vld [vmem:[#allocation10 + $0x18] sm:$0xff]
          %v1171 = vld [vmem:[#allocation10 + $0x20] sm:$0xff]
          %v1172 = vld [vmem:[#allocation10 + $0x28] sm:$0xff]
          %v1173 = vld [vmem:[#allocation10 + $0x30] sm:$0xff]
          %v1174 = vld [vmem:[#allocation10 + $0x38] sm:$0xff]
          %v1175 = vld [vmem:[#allocation10 + $0x40] sm:$0xff]
          %v1176 = vld [vmem:[#allocation10 + $0x48] sm:$0xff]
          %v1177 = vld [vmem:[#allocation10 + $0x50] sm:$0xff]
          %v1178 = vld [vmem:[#allocation10 + $0x58] sm:$0xff]
          %v1179 = vld [vmem:[#allocation10 + $0x60] sm:$0xff]
          %v1180 = vld [vmem:[#allocation10 + $0x68] sm:$0xff]
          %v1181 = vld [vmem:[#allocation10 + $0x70] sm:$0xff]
          %v1182 = vld [vmem:[#allocation10 + $0x78] sm:$0xff]
          %v1183 = vld [vmem:[#allocation10 + $0x80] sm:$0xff]
          %v1184 = vld [vmem:[#allocation10 + $0x88] sm:$0xff]
          %v1185 = vld [vmem:[#allocation10 + $0x90] sm:$0xff]
          %v1186 = vld [vmem:[#allocation10 + $0x98] sm:$0xff]
          %v1187 = vld [vmem:[#allocation10 + $0xa0] sm:$0xff]
          %v1188 = vld [vmem:[#allocation10 + $0xa8] sm:$0xff]
          %v1189 = vld [vmem:[#allocation10 + $0xb0] sm:$0xff]
          %v1190 = vld [vmem:[#allocation10 + $0xb8] sm:$0xff]
          %v1191 = vld [vmem:[#allocation10 + $0xc0] sm:$0xff]
          %v1192 = vld [vmem:[#allocation10 + $0xc8] sm:$0xff]
          %v1193 = vld [vmem:[#allocation10 + $0xd0] sm:$0xff]
          %v1194 = vld [vmem:[#allocation10 + $0xd8] sm:$0xff]
          %v1195 = vld [vmem:[#allocation10 + $0xe0] sm:$0xff]
          %v1196 = vld [vmem:[#allocation10 + $0xe8] sm:$0xff]
          %v1197 = vld [vmem:[#allocation10 + $0xf0] sm:$0xff]
          %v1198 = vld [vmem:[#allocation10 + $0xf8] sm:$0xff]
          %v1199 = vld [vmem:[#allocation10 + $0x100] sm:$0xff]
          %v1200 = vld [vmem:[#allocation10 + $0x108] sm:$0xff]
          %v1201 = vld [vmem:[#allocation10 + $0x110] sm:$0xff]
          %v1202 = vld [vmem:[#allocation10 + $0x118] sm:$0xff]
          %v1203 = vld [vmem:[#allocation10 + $0x120] sm:$0xff]
          %v1204 = vld [vmem:[#allocation10 + $0x128] sm:$0xff]
          %v1205 = vld [vmem:[#allocation10 + $0x130] sm:$0xff]
          %v1206 = vld [vmem:[#allocation10 + $0x138] sm:$0xff]
          %v1207 = vld [vmem:[#allocation10 + $0x140] sm:$0xff]
          %v1208 = vld [vmem:[#allocation10 + $0x148] sm:$0xff]
          %v1209 = vld [vmem:[#allocation10 + $0x150] sm:$0xff]
          %v1210 = vld [vmem:[#allocation10 + $0x158] sm:$0xff]
          %v1211 = vld [vmem:[#allocation10 + $0x160] sm:$0xff]
          %v1212 = vld [vmem:[#allocation10 + $0x168] sm:$0xff]
          %v1213 = vld [vmem:[#allocation10 + $0x170] sm:$0xff]
          %v1214 = vld [vmem:[#allocation10 + $0x178] sm:$0xff]
          %v1215 = vld [vmem:[#allocation10 + $0x180] sm:$0xff]
          %v1216 = vld [vmem:[#allocation10 + $0x188] sm:$0xff]
          %v1217 = vld [vmem:[#allocation10 + $0x190] sm:$0xff]
          %v1218 = vld [vmem:[#allocation10 + $0x198] sm:$0xff]
          %v1219 = vld [vmem:[#allocation10 + $0x1a0] sm:$0xff]
          %v1220 = vld [vmem:[#allocation10 + $0x1a8] sm:$0xff]
          %v1221 = vld [vmem:[#allocation10 + $0x1b0] sm:$0xff]
          %v1222 = vld [vmem:[#allocation10 + $0x1b8] sm:$0xff]
          %v1223 = vld [vmem:[#allocation10 + $0x1c0] sm:$0xff]
          %v1224 = vld [vmem:[#allocation10 + $0x1c8] sm:$0xff]
          %v1225 = vld [vmem:[#allocation10 + $0x1d0] sm:$0xff]
          %v1226 = vld [vmem:[#allocation10 + $0x1d8] sm:$0xff]
          %v1227 = vld [vmem:[#allocation10 + $0x1e0] sm:$0xff]
          %v1228 = vld [vmem:[#allocation10 + $0x1e8] sm:$0xff]
          %v1229 = vld [vmem:[#allocation10 + $0x1f0] sm:$0xff]
          %v1230 = vld [vmem:[#allocation10 + $0x1f8] sm:$0xff]
          %v1231 = vld [vmem:[%s6] sm:$0x3]
          %v1233 = vperm.slane %v1231, 0
          %v1234 = vperm.slane %v1231, 1
          %v1301 = vunpack.c.l.b16 %v1167
          %v1302 = vunpack.c.h.b16 %v1167
          %v1303 = vunpack.c.l.b16 %v1168
          %v1304 = vunpack.c.h.b16 %v1168
          %v1305 = vunpack.c.l.b16 %v1169
          %v1306 = vunpack.c.h.b16 %v1169
          %v1307 = vunpack.c.l.b16 %v1170
          %v1308 = vunpack.c.h.b16 %v1170
          %v1309 = vunpack.c.l.b16 %v1171
          %v1310 = vunpack.c.h.b16 %v1171
          %v1311 = vunpack.c.l.b16 %v1172
          %v1312 = vunpack.c.h.b16 %v1172
          %v1313 = vunpack.c.l.b16 %v1173
          %v1314 = vunpack.c.h.b16 %v1173
          %v1315 = vunpack.c.l.b16 %v1174
          %v1316 = vunpack.c.h.b16 %v1174
          %v1317 = vunpack.c.l.b16 %v1175
          %v1318 = vunpack.c.h.b16 %v1175
          %v1319 = vunpack.c.l.b16 %v1176
          %v1320 = vunpack.c.h.b16 %v1176
          %v1321 = vunpack.c.l.b16 %v1177
          %v1322 = vunpack.c.h.b16 %v1177
          %v1323 = vunpack.c.l.b16 %v1178
          %v1324 = vunpack.c.h.b16 %v1178
          %v1325 = vunpack.c.l.b16 %v1179
          %v1326 = vunpack.c.h.b16 %v1179
          %v1327 = vunpack.c.l.b16 %v1180
          %v1328 = vunpack.c.h.b16 %v1180
          %v1329 = vunpack.c.l.b16 %v1181
          %v1330 = vunpack.c.h.b16 %v1181
          %v1331 = vunpack.c.l.b16 %v1182
          %v1332 = vunpack.c.h.b16 %v1182
          %v1333 = vunpack.c.l.b16 %v1183
          %v1334 = vunpack.c.h.b16 %v1183
          %v1335 = vunpack.c.l.b16 %v1184
          %v1336 = vunpack.c.h.b16 %v1184
          %v1337 = vunpack.c.l.b16 %v1185
          %v1338 = vunpack.c.h.b16 %v1185
          %v1339 = vunpack.c.l.b16 %v1186
          %v1340 = vunpack.c.h.b16 %v1186
          %v1341 = vunpack.c.l.b16 %v1187
          %v1342 = vunpack.c.h.b16 %v1187
          %v1343 = vunpack.c.l.b16 %v1188
          %v1344 = vunpack.c.h.b16 %v1188
          %v1345 = vunpack.c.l.b16 %v1189
          %v1346 = vunpack.c.h.b16 %v1189
          %v1347 = vunpack.c.l.b16 %v1190
          %v1348 = vunpack.c.h.b16 %v1190
          %v1349 = vunpack.c.l.b16 %v1191
          %v1350 = vunpack.c.h.b16 %v1191
          %v1351 = vunpack.c.l.b16 %v1192
          %v1352 = vunpack.c.h.b16 %v1192
          %v1353 = vunpack.c.l.b16 %v1193
          %v1354 = vunpack.c.h.b16 %v1193
          %v1355 = vunpack.c.l.b16 %v1194
          %v1356 = vunpack.c.h.b16 %v1194
          %v1357 = vunpack.c.l.b16 %v1195
          %v1358 = vunpack.c.h.b16 %v1195
          %v1359 = vunpack.c.l.b16 %v1196
          %v1360 = vunpack.c.h.b16 %v1196
          %v1361 = vunpack.c.l.b16 %v1197
          %v1362 = vunpack.c.h.b16 %v1197
          %v1363 = vunpack.c.l.b16 %v1198
          %v1364 = vunpack.c.h.b16 %v1198
          %v1365 = vunpack.c.l.b16 %v1199
          %v1366 = vunpack.c.h.b16 %v1199
          %v1367 = vunpack.c.l.b16 %v1200
          %v1368 = vunpack.c.h.b16 %v1200
          %v1369 = vunpack.c.l.b16 %v1201
          %v1370 = vunpack.c.h.b16 %v1201
          %v1371 = vunpack.c.l.b16 %v1202
          %v1372 = vunpack.c.h.b16 %v1202
          %v1373 = vunpack.c.l.b16 %v1203
          %v1374 = vunpack.c.h.b16 %v1203
          %v1375 = vunpack.c.l.b16 %v1204
          %v1376 = vunpack.c.h.b16 %v1204
          %v1377 = vunpack.c.l.b16 %v1205
          %v1378 = vunpack.c.h.b16 %v1205
          %v1379 = vunpack.c.l.b16 %v1206
          %v1380 = vunpack.c.h.b16 %v1206
          %v1381 = vunpack.c.l.b16 %v1207
          %v1382 = vunpack.c.h.b16 %v1207
          %v1383 = vunpack.c.l.b16 %v1208
          %v1384 = vunpack.c.h.b16 %v1208
          %v1385 = vunpack.c.l.b16 %v1209
          %v1386 = vunpack.c.h.b16 %v1209
          %v1387 = vunpack.c.l.b16 %v1210
          %v1388 = vunpack.c.h.b16 %v1210
          %v1389 = vunpack.c.l.b16 %v1211
          %v1390 = vunpack.c.h.b16 %v1211
          %v1391 = vunpack.c.l.b16 %v1212
          %v1392 = vunpack.c.h.b16 %v1212
          %v1393 = vunpack.c.l.b16 %v1213
          %v1394 = vunpack.c.h.b16 %v1213
          %v1395 = vunpack.c.l.b16 %v1214
          %v1396 = vunpack.c.h.b16 %v1214
          %v1397 = vunpack.c.l.b16 %v1215
          %v1398 = vunpack.c.h.b16 %v1215
          %v1399 = vunpack.c.l.b16 %v1216
          %v1400 = vunpack.c.h.b16 %v1216
          %v1401 = vunpack.c.l.b16 %v1217
          %v1402 = vunpack.c.h.b16 %v1217
          %v1403 = vunpack.c.l.b16 %v1218
          %v1404 = vunpack.c.h.b16 %v1218
          %v1405 = vunpack.c.l.b16 %v1219
          %v1406 = vunpack.c.h.b16 %v1219
          %v1407 = vunpack.c.l.b16 %v1220
          %v1408 = vunpack.c.h.b16 %v1220
          %v1409 = vunpack.c.l.b16 %v1221
          %v1410 = vunpack.c.h.b16 %v1221
          %v1411 = vunpack.c.l.b16 %v1222
          %v1412 = vunpack.c.h.b16 %v1222
          %v1413 = vunpack.c.l.b16 %v1223
          %v1414 = vunpack.c.h.b16 %v1223
          %v1415 = vunpack.c.l.b16 %v1224
          %v1416 = vunpack.c.h.b16 %v1224
          %v1417 = vunpack.c.l.b16 %v1225
          %v1418 = vunpack.c.h.b16 %v1225
          %v1419 = vunpack.c.l.b16 %v1226
          %v1420 = vunpack.c.h.b16 %v1226
          %v1421 = vunpack.c.l.b16 %v1227
          %v1422 = vunpack.c.h.b16 %v1227
          %v1423 = vunpack.c.l.b16 %v1228
          %v1424 = vunpack.c.h.b16 %v1228
          %v1425 = vunpack.c.l.b16 %v1229
          %v1426 = vunpack.c.h.b16 %v1229
          %v1427 = vunpack.c.l.b16 %v1230
          %v1428 = vunpack.c.h.b16 %v1230
          %v1429 = vpack.c.b16 %v1303, %v1301
          %v1430 = vpack.c.b16 %v1304, %v1302
          %v1431 = vpack.c.b16 %v1307, %v1305
          %v1432 = vpack.c.b16 %v1308, %v1306
          %v1433 = vpack.c.b16 %v1311, %v1309
          %v1434 = vpack.c.b16 %v1312, %v1310
          %v1435 = vpack.c.b16 %v1315, %v1313
          %v1436 = vpack.c.b16 %v1316, %v1314
          %v1437 = vpack.c.b16 %v1319, %v1317
          %v1438 = vpack.c.b16 %v1320, %v1318
          %v1439 = vpack.c.b16 %v1323, %v1321
          %v1440 = vpack.c.b16 %v1324, %v1322
          %v1441 = vpack.c.b16 %v1327, %v1325
          %v1442 = vpack.c.b16 %v1328, %v1326
          %v1443 = vpack.c.b16 %v1331, %v1329
          %v1444 = vpack.c.b16 %v1332, %v1330
          %v1445 = vpack.c.b16 %v1335, %v1333
          %v1446 = vpack.c.b16 %v1336, %v1334
          %v1447 = vpack.c.b16 %v1339, %v1337
          %v1448 = vpack.c.b16 %v1340, %v1338
          %v1449 = vpack.c.b16 %v1343, %v1341
          %v1450 = vpack.c.b16 %v1344, %v1342
          %v1451 = vpack.c.b16 %v1347, %v1345
          %v1452 = vpack.c.b16 %v1348, %v1346
          %v1453 = vpack.c.b16 %v1351, %v1349
          %v1454 = vpack.c.b16 %v1352, %v1350
          %v1455 = vpack.c.b16 %v1355, %v1353
          %v1456 = vpack.c.b16 %v1356, %v1354
          %v1457 = vpack.c.b16 %v1359, %v1357
          %v1458 = vpack.c.b16 %v1360, %v1358
          %v1459 = vpack.c.b16 %v1363, %v1361
          %v1460 = vpack.c.b16 %v1364, %v1362
          %v1461 = vpack.c.b16 %v1367, %v1365
          %v1462 = vpack.c.b16 %v1368, %v1366
          %v1463 = vpack.c.b16 %v1371, %v1369
          %v1464 = vpack.c.b16 %v1372, %v1370
          %v1465 = vpack.c.b16 %v1375, %v1373
          %v1466 = vpack.c.b16 %v1376, %v1374
          %v1467 = vpack.c.b16 %v1379, %v1377
          %v1468 = vpack.c.b16 %v1380, %v1378
          %v1469 = vpack.c.b16 %v1383, %v1381
          %v1470 = vpack.c.b16 %v1384, %v1382
          %v1471 = vpack.c.b16 %v1387, %v1385
          %v1472 = vpack.c.b16 %v1388, %v1386
          %v1473 = vpack.c.b16 %v1391, %v1389
          %v1474 = vpack.c.b16 %v1392, %v1390
          %v1475 = vpack.c.b16 %v1395, %v1393
          %v1476 = vpack.c.b16 %v1396, %v1394
          %v1477 = vpack.c.b16 %v1399, %v1397
          %v1478 = vpack.c.b16 %v1400, %v1398
          %v1479 = vpack.c.b16 %v1403, %v1401
          %v1480 = vpack.c.b16 %v1404, %v1402
          %v1481 = vpack.c.b16 %v1407, %v1405
          %v1482 = vpack.c.b16 %v1408, %v1406
          %v1483 = vpack.c.b16 %v1411, %v1409
          %v1484 = vpack.c.b16 %v1412, %v1410
          %v1485 = vpack.c.b16 %v1415, %v1413
          %v1486 = vpack.c.b16 %v1416, %v1414
          %v1487 = vpack.c.b16 %v1419, %v1417
          %v1488 = vpack.c.b16 %v1420, %v1418
          %v1489 = vpack.c.b16 %v1423, %v1421
          %v1490 = vpack.c.b16 %v1424, %v1422
          %v1491 = vpack.c.b16 %v1427, %v1425
          %v1492 = vpack.c.b16 %v1428, %v1426
          %1557 = vmatpush.bf16.msra.mxu0 %v1443
          %1558 = vmatpush.bf16.msra.mxu0 %v1441
          %1559 = vmatpush.bf16.msra.mxu0 %v1439
          %1560 = vmatpush.bf16.msra.mxu0 %v1437
          %1561 = vmatpush.bf16.msra.mxu0 %v1435
          %1562 = vmatpush.bf16.msra.mxu0 %v1433
          %1563 = vmatpush.bf16.msra.mxu0 %v1431
          %1564 = vmatpush.bf16.msra.mxu0 %v1429
          %1565 = vmatmul.bf16.gmra.mxu0 %v1163
          %v1566 = vpop.f32.mrf.mxu0
          %v1567 = vadd.f32 %v1233, %v1566
          %v1568 = vpop.f32.mrf.mxu0
          %1569 = vdwg.mxu0
          %1570 = vmatpush.bf16.msra.mxu0 %v1459
          %1571 = vmatpush.bf16.msra.mxu0 %v1457
          %1572 = vmatpush.bf16.msra.mxu0 %v1455
          %1573 = vmatpush.bf16.msra.mxu0 %v1453
          %1574 = vmatpush.bf16.msra.mxu0 %v1451
          %1575 = vmatpush.bf16.msra.mxu0 %v1449
          %1576 = vmatpush.bf16.msra.mxu0 %v1447
          %1577 = vmatpush.bf16.msra.mxu0 %v1445
          %1578 = vmatmul.bf16.gmra.mxu0 %v1164
          %v1579 = vpop.f32.mrf.mxu0
          %v1580 = vadd.f32 %v1567, %v1579
          %v1581 = vpop.f32.mrf.mxu0
          %1582 = vdwg.mxu0
          %1583 = vmatpush.bf16.msra.mxu0 %v1475
          %1584 = vmatpush.bf16.msra.mxu0 %v1473
          %1585 = vmatpush.bf16.msra.mxu0 %v1471
          %1586 = vmatpush.bf16.msra.mxu0 %v1469
          %1587 = vmatpush.bf16.msra.mxu0 %v1467
          %1588 = vmatpush.bf16.msra.mxu0 %v1465
          %1589 = vmatpush.bf16.msra.mxu0 %v1463
          %1590 = vmatpush.bf16.msra.mxu0 %v1461
          %1591 = vmatmul.bf16.gmra.mxu0 %v1165
          %v1592 = vpop.f32.mrf.mxu0
          %v1593 = vadd.f32 %v1580, %v1592
          %v1594 = vpop.f32.mrf.mxu0
          %1595 = vdwg.mxu0
          %1596 = vmatpush.bf16.msra.mxu0 %v1491
          %1597 = vmatpush.bf16.msra.mxu0 %v1489
          %1598 = vmatpush.bf16.msra.mxu0 %v1487
          %1599 = vmatpush.bf16.msra.mxu0 %v1485
          %1600 = vmatpush.bf16.msra.mxu0 %v1483
          %1601 = vmatpush.bf16.msra.mxu0 %v1481
          %1602 = vmatpush.bf16.msra.mxu0 %v1479
          %1603 = vmatpush.bf16.msra.mxu0 %v1477
          %1604 = vmatmul.bf16.gmra.mxu0 %v1166
          %v1605 = vpop.f32.mrf.mxu0
          %v1606 = vadd.f32 %v1593, %v1605
          %v1607 = vpop.f32.mrf.mxu0
          %1608 = vdwg.mxu0
          %1609 = vmatpush.bf16.msra.mxu0 %v1444
          %1610 = vmatpush.bf16.msra.mxu0 %v1442
          %1611 = vmatpush.bf16.msra.mxu0 %v1440
          %1612 = vmatpush.bf16.msra.mxu0 %v1438
          %1613 = vmatpush.bf16.msra.mxu0 %v1436
          %1614 = vmatpush.bf16.msra.mxu0 %v1434
          %1615 = vmatpush.bf16.msra.mxu0 %v1432
          %1616 = vmatpush.bf16.msra.mxu0 %v1430
          %1617 = vmatmul.bf16.gmra.mxu0 %v1163
          %v1618 = vpop.f32.mrf.mxu0
          %v1619 = vadd.f32 %v1234, %v1618
          %v1620 = vpop.f32.mrf.mxu0
          %1621 = vdwg.mxu0
          %1622 = vmatpush.bf16.msra.mxu0 %v1460
          %1623 = vmatpush.bf16.msra.mxu0 %v1458
          %1624 = vmatpush.bf16.msra.mxu0 %v1456
          %1625 = vmatpush.bf16.msra.mxu0 %v1454
          %1626 = vmatpush.bf16.msra.mxu0 %v1452
          %1627 = vmatpush.bf16.msra.mxu0 %v1450
          %1628 = vmatpush.bf16.msra.mxu0 %v1448
          %1629 = vmatpush.bf16.msra.mxu0 %v1446
          %1630 = vmatmul.bf16.gmra.mxu0 %v1164
          %v1631 = vpop.f32.mrf.mxu0
          %v1632 = vadd.f32 %v1619, %v1631
          %v1633 = vpop.f32.mrf.mxu0
          %1634 = vdwg.mxu0
          %1635 = vmatpush.bf16.msra.mxu0 %v1476
          %1636 = vmatpush.bf16.msra.mxu0 %v1474
          %1637 = vmatpush.bf16.msra.mxu0 %v1472
          %1638 = vmatpush.bf16.msra.mxu0 %v1470
          %1639 = vmatpush.bf16.msra.mxu0 %v1468
          %1640 = vmatpush.bf16.msra.mxu0 %v1466
          %1641 = vmatpush.bf16.msra.mxu0 %v1464
          %1642 = vmatpush.bf16.msra.mxu0 %v1462
          %1643 = vmatmul.bf16.gmra.mxu0 %v1165
          %v1644 = vpop.f32.mrf.mxu0
          %v1645 = vadd.f32 %v1632, %v1644
          %v1646 = vpop.f32.mrf.mxu0
          %1647 = vdwg.mxu0
          %1648 = vmatpush.bf16.msra.mxu0 %v1492
          %1649 = vmatpush.bf16.msra.mxu0 %v1490
          %1650 = vmatpush.bf16.msra.mxu0 %v1488
          %1651 = vmatpush.bf16.msra.mxu0 %v1486
          %1652 = vmatpush.bf16.msra.mxu0 %v1484
          %1653 = vmatpush.bf16.msra.mxu0 %v1482
          %1654 = vmatpush.bf16.msra.mxu0 %v1480
          %1655 = vmatpush.bf16.msra.mxu0 %v1478
          %1656 = vmatmul.bf16.gmra.mxu0 %v1166
          %v1657 = vpop.f32.mrf.mxu0
          %v1658 = vadd.f32 %v1645, %v1657
          %v1659 = vpop.f32.mrf.mxu0
          %1660 = vdwg.mxu0
          %v1661 = vmax.f32 %v1606, 0.0
          %v1662 = vmax.f32 %v1658, 0.0
          %v1663 = vpack.c.bf16 %v1661, %v1661
          %v1664 = vpack.c.bf16 %v1662, %v1662
          %v1665 = vld [vmem:[#allocation11] sm:$0xf]
          %v1666 = vld [vmem:[#allocation11 + $0x4] sm:$0xf]
          %v1667 = vld [vmem:[#allocation11 + $0x8] sm:$0xf]
          %v1668 = vld [vmem:[#allocation11 + $0xc] sm:$0xf]
          %v1669 = vld [vmem:[#allocation11 + $0x10] sm:$0xf]
          %v1670 = vld [vmem:[#allocation11 + $0x14] sm:$0xf]
          %v1671 = vld [vmem:[#allocation11 + $0x18] sm:$0xf]
          %v1672 = vld [vmem:[#allocation11 + $0x1c] sm:$0xf]
          %v1673 = vld [vmem:[#allocation11 + $0x20] sm:$0xf]
          %v1674 = vld [vmem:[#allocation11 + $0x24] sm:$0xf]
          %v1675 = vld [vmem:[#allocation11 + $0x28] sm:$0xf]
          %v1676 = vld [vmem:[#allocation11 + $0x2c] sm:$0xf]
          %v1677 = vld [vmem:[#allocation11 + $0x30] sm:$0xf]
          %v1678 = vld [vmem:[#allocation11 + $0x34] sm:$0xf]
          %v1679 = vld [vmem:[#allocation11 + $0x38] sm:$0xf]
          %v1680 = vld [vmem:[#allocation11 + $0x3c] sm:$0xf]
          %v1681 = vld [vmem:[#allocation11 + $0x40] sm:$0xf]
          %v1682 = vld [vmem:[#allocation11 + $0x44] sm:$0xf]
          %v1683 = vld [vmem:[#allocation11 + $0x48] sm:$0xf]
          %v1684 = vld [vmem:[#allocation11 + $0x4c] sm:$0xf]
          %v1685 = vld [vmem:[#allocation11 + $0x50] sm:$0xf]
          %v1686 = vld [vmem:[#allocation11 + $0x54] sm:$0xf]
          %v1687 = vld [vmem:[#allocation11 + $0x58] sm:$0xf]
          %v1688 = vld [vmem:[#allocation11 + $0x5c] sm:$0xf]
          %v1689 = vld [vmem:[#allocation11 + $0x60] sm:$0xf]
          %v1690 = vld [vmem:[#allocation11 + $0x64] sm:$0xf]
          %v1691 = vld [vmem:[#allocation11 + $0x68] sm:$0xf]
          %v1692 = vld [vmem:[#allocation11 + $0x6c] sm:$0xf]
          %v1693 = vld [vmem:[#allocation11 + $0x70] sm:$0xf]
          %v1694 = vld [vmem:[#allocation11 + $0x74] sm:$0xf]
          %v1695 = vld [vmem:[#allocation11 + $0x78] sm:$0xf]
          %v1696 = vld [vmem:[#allocation11 + $0x7c] sm:$0xf]
          %v1697 = vld [vmem:[%s8] sm:$0x1]
          %v1699 = vperm.slane %v1697, 0
          %v1733 = vunpack.c.l.b16 %v1665
          %v1734 = vunpack.c.l.b16 %v1666
          %v1735 = vunpack.c.l.b16 %v1667
          %v1736 = vunpack.c.l.b16 %v1668
          %v1737 = vunpack.c.l.b16 %v1669
          %v1738 = vunpack.c.l.b16 %v1670
          %v1739 = vunpack.c.l.b16 %v1671
          %v1740 = vunpack.c.l.b16 %v1672
          %v1741 = vunpack.c.l.b16 %v1673
          %v1742 = vunpack.c.l.b16 %v1674
          %v1743 = vunpack.c.l.b16 %v1675
          %v1744 = vunpack.c.l.b16 %v1676
          %v1745 = vunpack.c.l.b16 %v1677
          %v1746 = vunpack.c.l.b16 %v1678
          %v1747 = vunpack.c.l.b16 %v1679
          %v1748 = vunpack.c.l.b16 %v1680
          %v1749 = vunpack.c.l.b16 %v1681
          %v1750 = vunpack.c.l.b16 %v1682
          %v1751 = vunpack.c.l.b16 %v1683
          %v1752 = vunpack.c.l.b16 %v1684
          %v1753 = vunpack.c.l.b16 %v1685
          %v1754 = vunpack.c.l.b16 %v1686
          %v1755 = vunpack.c.l.b16 %v1687
          %v1756 = vunpack.c.l.b16 %v1688
          %v1757 = vunpack.c.l.b16 %v1689
          %v1758 = vunpack.c.l.b16 %v1690
          %v1759 = vunpack.c.l.b16 %v1691
          %v1760 = vunpack.c.l.b16 %v1692
          %v1761 = vunpack.c.l.b16 %v1693
          %v1762 = vunpack.c.l.b16 %v1694
          %v1763 = vunpack.c.l.b16 %v1695
          %v1764 = vunpack.c.l.b16 %v1696
          %v1765 = vpack.c.b16 %v1734, %v1733
          %v1766 = vpack.c.b16 %v1736, %v1735
          %v1767 = vpack.c.b16 %v1738, %v1737
          %v1768 = vpack.c.b16 %v1740, %v1739
          %v1769 = vpack.c.b16 %v1742, %v1741
          %v1770 = vpack.c.b16 %v1744, %v1743
          %v1771 = vpack.c.b16 %v1746, %v1745
          %v1772 = vpack.c.b16 %v1748, %v1747
          %v1773 = vpack.c.b16 %v1750, %v1749
          %v1774 = vpack.c.b16 %v1752, %v1751
          %v1775 = vpack.c.b16 %v1754, %v1753
          %v1776 = vpack.c.b16 %v1756, %v1755
          %v1777 = vpack.c.b16 %v1758, %v1757
          %v1778 = vpack.c.b16 %v1760, %v1759
          %v1779 = vpack.c.b16 %v1762, %v1761
          %v1780 = vpack.c.b16 %v1764, %v1763
          %1797 = vmatpush.bf16.msra.mxu0 %v1772
          %1798 = vmatpush.bf16.msra.mxu0 %v1771
          %1799 = vmatpush.bf16.msra.mxu0 %v1770
          %1800 = vmatpush.bf16.msra.mxu0 %v1769
          %1801 = vmatpush.bf16.msra.mxu0 %v1768
          %1802 = vmatpush.bf16.msra.mxu0 %v1767
          %1803 = vmatpush.bf16.msra.mxu0 %v1766
          %1804 = vmatpush.bf16.msra.mxu0 %v1765
          %1805 = vmatmul.bf16.gmra.mxu0 %v1663
          %v1806 = vpop.f32.mrf.mxu0
          %v1807 = vadd.f32 %v1699, %v1806
          %v1808 = vpop.f32.mrf.mxu0
          %1809 = vdwg.mxu0
          %1810 = vmatpush.bf16.msra.mxu0 %v1780
          %1811 = vmatpush.bf16.msra.mxu0 %v1779
          %1812 = vmatpush.bf16.msra.mxu0 %v1778
          %1813 = vmatpush.bf16.msra.mxu0 %v1777
          %1814 = vmatpush.bf16.msra.mxu0 %v1776
          %1815 = vmatpush.bf16.msra.mxu0 %v1775
          %1816 = vmatpush.bf16.msra.mxu0 %v1774
          %1817 = vmatpush.bf16.msra.mxu0 %v1773
          %1818 = vmatmul.bf16.gmra.mxu0 %v1664
          %v1819 = vpop.f32.mrf.mxu0
          %v1820 = vadd.f32 %v1807, %v1819
          %v1821 = vpop.f32.mrf.mxu0
          %1822 = vdwg.mxu0
          %1823 = vst [vmem:[#allocation13] sm:$0xff] %v1820
        $region80: #{tpu_custom_call.1} parent=55 // pred_fallthru
          _
        // Predicated region
        $region81: #{tpu_custom_call.1} parent=55 // pred_check
          %p1824 = pneg %p260
        $region82: #{tpu_custom_call.1} parent=55 // pred_check_branch
          %1826 = sbr.rel (%p1824) target = $region84
        $region83: #{tpu_custom_call.1} parent=55 // pred_region
          %1828 = vsyncadd [#allocation7], 0
          %s1829 = smul.addr %s30, 8
          %s1830 = scalar_lea.hbm %s9, %s1829
          %s1832 = sshll.u32 [#allocation13], 4
          %s1833 = int_to_ptr.vmem [resolvable:$true] %s1832
          %s1834 = sshll.u32 %s1830, 4
          %s1835 = int_to_ptr.hbm [resolvable:$true] %s1834
          %1837 = dma.vmem_to_hbm [thread:$0]  %s1833, 128, %s1835, [#allocation7]
        $region84: #{tpu_custom_call.1} parent=55 // pred_fallthru
          _
        // Predicated region
        $region85: #{tpu_custom_call.1} parent=55 // pred_check
          %p1838 = pneg %p260
        $region86: #{tpu_custom_call.1} parent=55 // pred_check_branch
          %1840 = sbr.rel (%p1838) target = $region88
        $region87: #{tpu_custom_call.1} parent=55 // pred_region
          %1842 = dma.done [#allocation7], 128
        $region88: #{tpu_custom_call.1} parent=55 // pred_fallthru
          _
      $region56: #{tpu_custom_call.1} parent=5 // pred_fallthru
        _
      %p1843 = scmp.le.s32.totalorder 2, %s21
      // Predicated region
      $region89: #{tpu_custom_call.1} parent=5 // pred_check
        %p1844 = pneg %p1843
      $region90: #{tpu_custom_call.1} parent=5 // pred_check_branch
        %1846 = sbr.rel (%p1844) target = $region92
      $region91: #{tpu_custom_call.1} parent=5 // pred_region
        %s1847 = ssub.s32 %s21, 2
      $region92: #{tpu_custom_call.1} parent=5 // pred_fallthru
        _
    $region6: #{tpu_custom_call.1} parent=1 // loop_footer
      %s25 = sadd.s32 1, %s21
    $region7: #{tpu_custom_call.1} parent=1 // loop_footer_branch
      %20 = sbr.rel target = $region3
    $region8: #{tpu_custom_call.1} parent=1 // loop_exit
      _
    %1848 = vsyncpa [#allocation6], 1
    %s1849 = scalar_lea.sflag [#allocation6], 1
    %1850 = vsyncpa %s1849, 1
    %1851 = vsyncpa [#allocation9], 1
    %1852 = vsyncpa [#allocation12], 1
    %1853 = vsyncpa [#allocation7], 1
    %s1854 = scalar_lea.sflag [#allocation7], 1
    %1855 = vsyncpa %s1854, 1

</llo_original>
